<compile_context>
chip_gen: v7x
topology: tpu7x:2x2x1
jax: 0.10.0
libtpu: 0.0.40
codegen_flags: <defaults>
</compile_context>

<pallas_src>
import functools

import jax
import jax.numpy as jnp
from jax import lax
from jax.experimental import pallas as pl
from jax.experimental.pallas import tpu as pltpu


def _round_up(n, m):
    return ((n + m - 1) // m) * m


def _tpu_vmem_limit_bytes():
    """Generation-aware scoped-VMEM limit (~3/4 of per-core VMEM, capped)."""
    try:
        cap = int(pltpu.get_tpu_info().vmem_capacity_bytes)
    except Exception:
        cap = 64 << 20          # conservative fallback (v7x-like 64 MiB per core)
    return max(32 << 20, min((cap * 3) // 4, 100 << 20))


# ---------------------------------------------------------------------------
# Per-layer streaming kernel (large-graph fallback: adjacency re-read per layer)
# ---------------------------------------------------------------------------
def _streaming_layer(adj_i8, xs, dis, w_bf16, b_f32, *, apply_relu, add_self_loops,
                     tm, vmem_limit):
    """One GCNConv layer: out = dis ⊙ (A[+I] @ xs) @ W + b [, ReLU],
    xs = dis ⊙ h pre-scaled to bf16 in the wrapper, A streamed as int8 row tiles."""
    np_, c_in = xs.shape
    c_out_p = w_bf16.shape[1]
    assert np_ % tm == 0
    grid = (np_ // tm,)

    def kernel(adj_ref, xs_ref, dis_row_ref, w_ref, b_ref, *rest):
        out_ref = rest[-1]
        # int8 0/1 row tile -> bf16 right before the MXU (cast hidden under the DMA).
        a_tile = adj_ref[...].astype(jnp.bfloat16)                        # [TM, Np]
        agg = jnp.dot(a_tile, xs_ref[...], preferred_element_type=jnp.float32)
        if add_self_loops:
            # (A + I) folded algebraically: += (dis ⊙ h) row tile (no N^2 identity).
            agg = agg + rest[0][...].astype(jnp.float32)
        out = jnp.dot(agg.astype(jnp.bfloat16), w_ref[...],
                      preferred_element_type=jnp.float32)                 # [TM, Coutp]
        out = dis_row_ref[...] * out + b_ref[...]
        if apply_relu:
            out = jnp.maximum(out, 0.0)
        out_ref[...] = out.astype(out_ref.dtype)

    # TODO(synk): pipeline_mode=pl.Buffered(1) on the grid-invariant operands
    # (xs/W/b) would halve their resident VMEM on v7x once pallas_call honors it.
    in_specs = [
        pl.BlockSpec((tm, np_), lambda i: (i, 0)),          # adjacency row tile (int8)
        pl.BlockSpec((np_, c_in), lambda i: (0, 0)),        # xs = dis ⊙ h (bf16, resident)
        pl.BlockSpec((tm, 1), lambda i: (i, 0)),            # deg^-1/2 row tile
        pl.BlockSpec((c_in, c_out_p), lambda i: (0, 0)),    # W (bf16, resident)
        pl.BlockSpec((1, c_out_p), lambda i: (0, 0)),       # bias (resident)
    ]
    args = [adj_i8, xs, dis, w_bf16, b_f32]
    if add_self_loops:
        in_specs.append(pl.BlockSpec((tm, c_in), lambda i: (i, 0)))   # xs row tile
        args.append(xs)

    flops = 2 * np_ * np_ * c_in + 2 * np_ * c_in * c_out_p
    bytes_accessed = (np_ * np_ + np_ * c_in * 2 + np_ * c_out_p * 4
                      + c_in * c_out_p * 2 + c_out_p * 4 + np_ * 4)

    return pl.pallas_call(
        kernel,
        out_shape=jax.ShapeDtypeStruct((np_, c_out_p), jnp.float32),
        grid_spec=pltpu.PrefetchScalarGridSpec(
            num_scalar_prefetch=0, grid=grid,
            in_specs=in_specs,
            out_specs=pl.BlockSpec((tm, c_out_p), lambda i: (i, 0)),
        ),
        compiler_params=pltpu.CompilerParams(
            dimension_semantics=("parallel",),          # row tiles are independent
            vmem_limit_bytes=vmem_limit,
        ),
        cost_estimate=pl.CostEstimate(flops=flops, transcendentals=0,
                                      bytes_accessed=bytes_accessed),
    )(*args)


# ---------------------------------------------------------------------------
# Fused multi-layer kernel: adjacency VMEM-resident across ALL layers
# ---------------------------------------------------------------------------
def _fused_all_layers(adj_i8, xs0, dis, ws_bf16, bs_f32, *, num_layers,
                      add_self_loops, tm, vmem_limit):
    """All L layers in one kernel. The int8 adjacency is read from HBM ONCE and kept
    resident in VMEM; layer-to-layer features are carried in a VMEM ping-pong scratch
    (pre-scaled by dis, bf16), never round-tripped through HBM."""
    np_ = adj_i8.shape[0]
    cmax = xs0.shape[1]
    assert np_ % tm == 0
    grid = (num_layers, np_ // tm)          # layer axis outer, row tiles inner

    def kernel(adj_ref, xs0_ref, dis_row_ref, w_ref, b_ref, out_ref, h_a, h_b, agg):
        l = pl.program_id(0)
        i = pl.program_id(1)
        r0 = pl.multiple_of(i * tm, tm)
        # int8 0/1 row slice of the resident [Np, Np] adjacency -> bf16 for the MXU.
        a_tile = adj_ref[pl.ds(r0, tm), :].astype(jnp.bfloat16)           # [TM, Np]
        odd = (l % 2) == 1

        def aggregate(src_ref):
            acc = jnp.dot(a_tile, src_ref[...], preferred_element_type=jnp.float32)
            if add_self_loops:
                acc = acc + src_ref[pl.ds(r0, tm), :].astype(jnp.float32)
            agg[...] = acc

        # Aggregation source = pre-scaled features of the previous layer:
        # layer 0 reads xs0; odd layers read h_a; even layers (>0) read h_b.
        @pl.when(l == 0)
        def _():
            aggregate(xs0_ref)

        @pl.when(odd)
        def _():
            aggregate(h_a)

        @pl.when(jnp.logical_and(l > 0, jnp.logical_not(odd)))
        def _():
            aggregate(h_b)

        dis_row = dis_row_ref[...]                                        # [TM, 1]
        h = jnp.dot(agg[...].astype(jnp.bfloat16), w_ref[0],
                    preferred_element_type=jnp.float32)                   # [TM, Cmax]
        h = dis_row * h + b_ref[0]

        if num_layers == 1:
            # module: ReLU after the last conv iff num_layers == 1
            out_ref[...] = jnp.maximum(h, 0.0).astype(out_ref.dtype)
        else:
            not_last = l < num_layers - 1
            h = jnp.where(not_last, jnp.maximum(h, 0.0), h)
            # Same output block is rewritten once per layer; the final layer's
            # write is the last one to land in HBM (earlier ones are harmless).
            out_ref[...] = h.astype(out_ref.dtype)

            nxt = (dis_row * h).astype(h_a.dtype)   # next layer's pre-scaled input
            @pl.when(jnp.logical_and(not_last, jnp.logical_not(odd)))
            def _():
                h_a[pl.ds(r0, tm), :] = nxt

            @pl.when(jnp.logical_and(not_last, odd))
            def _():
                h_b[pl.ds(r0, tm), :] = nxt

    flops = num_layers * (2 * np_ * np_ * cmax + 2 * np_ * cmax * cmax)
    bytes_accessed = (np_ * np_ + np_ * cmax * 2 + np_ * 4 + np_ * cmax * 4
                      + num_layers * (cmax * cmax * 2 + cmax * 4))

    return pl.pallas_call(
        kernel,
        out_shape=jax.ShapeDtypeStruct((np_, cmax), jnp.float32),
        grid_spec=pltpu.PrefetchScalarGridSpec(
            num_scalar_prefetch=0, grid=grid,
            in_specs=[
                pl.BlockSpec((np_, np_), lambda l, i: (0, 0)),        # int8 A, resident
                pl.BlockSpec((np_, cmax), lambda l, i: (0, 0)),       # xs0 = dis ⊙ x, bf16
                pl.BlockSpec((tm, 1), lambda l, i: (i, 0)),           # deg^-1/2 row tile
                pl.BlockSpec((1, cmax, cmax), lambda l, i: (l, 0, 0)),  # W_l (bf16)
                pl.BlockSpec((1, 1, cmax), lambda l, i: (l, 0, 0)),     # b_l
            ],
            out_specs=pl.BlockSpec((tm, cmax), lambda l, i: (i, 0)),
            scratch_shapes=[
                pltpu.VMEM((np_, cmax), jnp.bfloat16),   # ping ...
                pltpu.VMEM((np_, cmax), jnp.bfloat16),   # ... pong feature carry
                pltpu.VMEM((tm, cmax), jnp.float32),     # aggregation accumulator
            ],
        ),
        compiler_params=pltpu.CompilerParams(
            # Features are carried in per-core scratch across row tiles and layers,
            # so both grid axes must execute sequentially on one core.
            dimension_semantics=("arbitrary", "arbitrary"),
            vmem_limit_bytes=vmem_limit,
        ),
        cost_estimate=pl.CostEstimate(flops=flops, transcendentals=0,
                                      bytes_accessed=bytes_accessed),
    )(adj_i8, xs0, dis, ws_bf16, bs_f32)


# ---------------------------------------------------------------------------
# BaseGNN forward
# ---------------------------------------------------------------------------
def base_gnn_forward(x, adj, weights, biases, *, dropout=0.0, training=False,
                     add_self_loops=False, row_tile=None, fused=None):
    """BaseGNN.forward (eval mode):
        [conv -> ReLU -> dropout] * (L-1) -> conv   (+ ReLU/dropout if L == 1)
    dropout is the identity in eval mode. Adjacency is assumed 0/1 (unweighted)."""
    if training and dropout > 0.0:
        # TODO(synk): training-mode F.dropout needs in-kernel pltpu.prng_*; only the
        # eval-mode (identity-dropout) forward is implemented.
        raise NotImplementedError("training-mode dropout not implemented")

    num_layers = len(weights)
    assert num_layers >= 1
    n = adj.shape[0]
    c_out_last = weights[-1].shape[1]

    vmem_limit = _tpu_vmem_limit_bytes()
    budget = int(vmem_limit * 0.8)

    # Feature widths each layer sees (hidden widths are padded to x128 so all
    # output stores are lane-dense).
    widths = [x.shape[1]] + [_round_up(w.shape[1], 128) for w in weights]
    max_w = max(widths)
    max_coutp = max(widths[1:])

    # ---- row-tile selection: biggest TM whose streaming working set fits the
    #      scoped-VMEM budget, keeping >= 2 tiles so both TensorCores get work ----
    if row_tile is not None:
        tm = row_tile
        np_p = _round_up(n, tm)
    else:
        np_p = _round_up(n, 128)
        cands = [c for c in (512, 256, 128) if np_p % c == 0 and np_p // c >= 2]
        if not cands:
            cands = [np_p]                       # tiny graph: single row tile
        tm = cands[-1]
        for c in cands:
            need = (2 * c * np_p                 # int8 adjacency row tiles (x2 buffers)
                    + 2 * np_p * max_w * 2       # resident bf16 features (x2 buffers)
                    + 2 * c * max_coutp * 4      # output tiles (x2 buffers)
                    + 2 * c * max_w * 2          # self-loop row tiles (x2 buffers)
                    + (1 << 20))                 # W/b/dis + slack
            if need <= budget:
                tm = c
                break
        # TODO(synk): for very large Np add a K-tiling grid axis over adjacency
        # columns (review item) so VMEM is bounded independent of N.

    # ---- pad graph, precompute deg^{-1/2} ONCE (adjacency is layer-invariant) ----
    adj_f = adj.astype(jnp.float32)
    x_f = x.astype(jnp.float32)
    if np_p != n:
        adj_f = jnp.pad(adj_f, ((0, np_p - n), (0, np_p - n)))
        x_f = jnp.pad(x_f, ((0, np_p - n), (0, 0)))
    deg = jnp.sum(adj_f, axis=1, keepdims=True)
    if add_self_loops:
        deg = deg + 1.0
    dis = jnp.where(deg > 0.0, lax.rsqrt(deg), 0.0).astype(jnp.float32)    # [Np, 1]
    # 0/1 adjacency stored as int8 (exact): quarters the dominant N^2 HBM read vs f32
    # (halves vs bf16); the bf16 upcast happens per-tile inside the kernels.
    adj_i8 = adj_f.astype(jnp.int8)

    # ---- fused (adjacency resident across all L layers) vs per-layer streaming ----
    cmax = max(_round_up(x.shape[1], 128), max_coutp)
    fused_need = (2 * np_p * np_p                # int8 adjacency (double-buffered input)
                  + 2 * np_p * cmax * 2          # resident bf16 xs0 (x2 buffers)
                  + 2 * np_p * cmax * 2          # ping-pong feature scratch
                  + 4 * tm * cmax * 4            # out blocks + agg scratch
                  + 4 * (cmax * cmax * 2 + cmax * 4)
                  + (1 << 20))
    if fused is None:
        fused = fused_need <= budget

    if fused:
        xs0 = jnp.pad(dis * x_f,
                      ((0, 0), (0, cmax - x_f.shape[1]))).astype(jnp.bfloat16)
        ws = jnp.stack([
            jnp.pad(w.astype(jnp.float32),
                    ((0, cmax - w.shape[0]), (0, cmax - w.shape[1])))
            for w in weights]).astype(jnp.bfloat16)                     # [L, Cmax, Cmax]
        bs = jnp.stack([
            jnp.pad(b.astype(jnp.float32).reshape(1, -1),
                    ((0, 0), (0, cmax - b.shape[0])))
            for b in biases])                                           # [L, 1, Cmax]
        out = _fused_all_layers(adj_i8, xs0, dis, ws, bs, num_layers=num_layers,
                                add_self_loops=add_self_loops, tm=tm,
                                vmem_limit=vmem_limit)
        return out[:n, :c_out_last]

    # streaming fallback: one fused kernel per layer (adjacency re-read per layer)
    h = x_f
    for layer in range(num_layers):
        w = weights[layer].astype(jnp.float32)
        c_out_p = _round_up(w.shape[1], 128)
        if w.shape[0] < h.shape[1]:          # h carries zero lane-padding from prev layer
            w = jnp.pad(w, ((0, h.shape[1] - w.shape[0]), (0, 0)))
        w = jnp.pad(w, ((0, 0), (0, c_out_p - w.shape[1]))).astype(jnp.bfloat16)
        b = jnp.pad(biases[layer].astype(jnp.float32).reshape(1, -1),
                    ((0, 0), (0, c_out_p - biases[layer].shape[0])))
        # Column-side normalization + bf16 cast hoisted out of the grid loop.
        xs = (dis * h).astype(jnp.bfloat16)
        apply_relu = (layer < num_layers - 1) or (num_layers == 1)
        h = _streaming_layer(adj_i8, xs, dis, w, b, apply_relu=apply_relu,
                             add_self_loops=add_self_loops, tm=tm,
                             vmem_limit=vmem_limit)
        # dropout: identity in eval mode (training=False).
    return h[:n, :c_out_last]


def _reference(x, adj, weights, biases, *, add_self_loops=False):
    """Pure-JAX f32 reference mirroring the PyTorch BaseGNN forward (eval mode)."""
    a = adj.astype(jnp.float32)
    if add_self_loops:
        a = a + jnp.eye(a.shape[0], dtype=jnp.float32)
    deg = a.sum(axis=1)
    dis = jnp.where(deg > 0.0, deg ** -0.5, 0.0)
    adj_n = a * dis[:, None] * dis[None, :]
    num_layers = len(weights)
    h = x.astype(jnp.float32)
    for layer, (w, b) in enumerate(zip(weights, biases)):
        h = adj_n @ (h @ w) + b[None, :]
        if layer < num_layers - 1 or num_layers == 1:
            h = jnp.maximum(h, 0.0)            # dropout = identity in eval mode
    return h


if __name__ == "__main__":
    key = jax.random.PRNGKey(0)
    k_adj, k_x, k_w1, k_w2, k_w3, k_b = jax.random.split(key, 6)

    # N nodes, 3-layer GCN 32 -> 64 -> 64 -> 48.
    n, c_in, c_hid, c_out = 256, 32, 64, 48
    dims = [(c_in, c_hid), (c_hid, c_hid), (c_hid, c_out)]

    # Deterministic sparse-ish symmetric 0/1 adjacency (already densified).
    adj = (jax.random.uniform(k_adj, (n, n)) < 0.06).astype(jnp.float32)
    adj = jnp.maximum(adj, adj.T)
    adj = adj * (1.0 - jnp.eye(n, dtype=jnp.float32))

    x = jax.random.normal(k_x, (n, c_in), dtype=jnp.float32)

    weights, biases = [], []
    for kk, (ci, co) in zip((k_w1, k_w2, k_w3), dims):
        bound = (6.0 / (ci + co)) ** 0.5               # xavier_uniform_
        weights.append(jax.random.uniform(kk, (ci, co), minval=-bound,
                                          maxval=bound, dtype=jnp.float32))
    for kk, (_, co) in zip(jax.random.split(k_b, len(dims)), dims):
        biases.append(0.1 * jax.random.normal(kk, (co,), dtype=jnp.float32))

    tol = dict(atol=3e-2, rtol=3e-2)   # bf16 MXU operands on both GEMMs (f32 accum)

    # 1) default path (adjacency VMEM-resident across all 3 layers at this size)
    fwd = jax.jit(functools.partial(base_gnn_forward, dropout=0.5, training=False,
                                    add_self_loops=False))
    out = jax.block_until_ready(fwd(x, adj, weights, biases))
    ref = _reference(x, adj, weights, biases, add_self_loops=False)
    assert out.shape == (n, c_out), out.shape
    assert jnp.allclose(out, ref, **tol), float(jnp.max(jnp.abs(out - ref)))

    # 2) per-layer streaming fallback (large-graph path), same math
    fwd_stream = jax.jit(functools.partial(base_gnn_forward, dropout=0.5,
                                           training=False, add_self_loops=False,
                                           fused=False))
    out_s = jax.block_until_ready(fwd_stream(x, adj, weights, biases))
    assert jnp.allclose(out_s, ref, **tol), float(jnp.max(jnp.abs(out_s - ref)))

    # 3) add_self_loops=True (exercises the folded (A + I) algebra)
    fwd_sl = jax.jit(functools.partial(base_gnn_forward, dropout=0.5, training=False,
                                       add_self_loops=True))
    out_sl = jax.block_until_ready(fwd_sl(x, adj, weights, biases))
    ref_sl = _reference(x, adj, weights, biases, add_self_loops=True)
    assert jnp.allclose(out_sl, ref_sl, **tol), float(jnp.max(jnp.abs(out_sl - ref_sl)))

    print("KERNEL_OK")
</pallas_src>

<mosaic_0001>
module attributes {stable_mosaic.version = 11 : i64} {
  func.func @kernel(%arg0: i32, %arg1: i32, %arg2: memref<256x256xi8, #tpu.memory_space<vmem>>, %arg3: memref<256x128xbf16, #tpu.memory_space<vmem>>, %arg4: memref<128x1xf32, #tpu.memory_space<vmem>>, %arg5: memref<1x128x128xbf16, #tpu.memory_space<vmem>>, %arg6: memref<1x1x128xf32, #tpu.memory_space<vmem>>, %arg7: memref<128x128xf32, #tpu.memory_space<vmem>>, %arg8: memref<256x128xbf16, #tpu.memory_space<vmem>>, %arg9: memref<256x128xbf16, #tpu.memory_space<vmem>>, %arg10: memref<128x128xf32, #tpu.memory_space<vmem>>) attributes {dimension_semantics = [#tpu.dimension_semantics<arbitrary>, #tpu.dimension_semantics<arbitrary>], iteration_bounds = array<i64: 3, 2>, scalar_prefetch = 0 : i64, scratch_operands = 3 : i64, tpu.core_type = #tpu.core_type<tc>, window_params = [{pipeline_mode = #tpu.pipeline_mode<synchronous>, transform_indices = @transform_0, window_bounds = array<i64: 256, 256>}, {pipeline_mode = #tpu.pipeline_mode<synchronous>, transform_indices = @transform_1, window_bounds = array<i64: 256, 128>}, {transform_indices = @transform_2, window_bounds = array<i64: 128, 1>}, {transform_indices = @transform_3, window_bounds = array<i64: 1, 128, 128>}, {transform_indices = @transform_4, window_bounds = array<i64: 1, 1, 128>}, {transform_indices = @transform_5, window_bounds = array<i64: 128, 128>}]} {
    %c128_i32 = arith.constant 128 : i32
    %0 = arith.muli %arg1, %c128_i32 : i32
    %1 = tpu.assume_multiple %0, 128 : i32
    %2 = arith.index_cast %1 : i32 to index
    %c0 = arith.constant 0 : index
    %3 = vector.load %arg2[%2, %c0] : memref<256x256xi8, #tpu.memory_space<vmem>>, vector<128x256xi8>
    %4 = arith.sitofp %3 : vector<128x256xi8> to vector<128x256xbf16>
    %c2_i32 = arith.constant 2 : i32
    %c0_i32 = arith.constant 0 : i32
    %5 = arith.cmpi eq, %c2_i32, %c0_i32 : i32
    %c1_i32 = arith.constant 1 : i32
    %6 = arith.select %5, %c1_i32, %c2_i32 : i32
    %7 = arith.remsi %arg0, %6 : i32
    %c0_i32_0 = arith.constant 0 : i32
    %8 = arith.cmpi ne, %7, %c0_i32_0 : i32
    %c0_i32_1 = arith.constant 0 : i32
    %9 = arith.cmpi slt, %7, %c0_i32_1 : i32
    %c0_i32_2 = arith.constant 0 : i32
    %10 = arith.cmpi slt, %6, %c0_i32_2 : i32
    %11 = arith.xori %9, %10 : i1
    %12 = arith.andi %11, %8 : i1
    %13 = arith.addi %7, %6 : i32
    %14 = arith.select %12, %13, %7 : i32
    %c1_i32_3 = arith.constant 1 : i32
    %15 = arith.cmpi eq, %14, %c1_i32_3 : i32
    %c0_i32_4 = arith.constant 0 : i32
    %16 = arith.cmpi eq, %arg0, %c0_i32_4 : i32
    %17 = arith.extui %16 : i1 to i32
    %c0_i32_5 = arith.constant 0 : i32
    %18 = arith.cmpi ne, %17, %c0_i32_5 : i32
    scf.if %18 {
      %c0_26 = arith.constant 0 : index
      %c0_27 = arith.constant 0 : index
      %53 = vector.load %arg3[%c0_26, %c0_27] : memref<256x128xbf16, #tpu.memory_space<vmem>>, vector<256x128xbf16>
      %cst_28 = arith.constant dense<0.000000e+00> : vector<128x128xf32>
      %54 = tpu.matmul %4, %53, %cst_28 {dimension_numbers = #tpu.dot_dimension_numbers<[1], [0], [0], [1], [0, 0, 1, 1], [], []>} : vector<128x256xbf16>, vector<256x128xbf16>, vector<128x128xf32> -> vector<128x128xf32>
      %c0_29 = arith.constant 0 : index
      %c0_30 = arith.constant 0 : index
      %55 = vector.load %arg10[%c0_29, %c0_30] : memref<128x128xf32, #tpu.memory_space<vmem>>, vector<128x128xf32>
      tpu.vector_store %arg10[%c0_29, %c0_30], %54 {strides = array<i32>} : memref<128x128xf32, #tpu.memory_space<vmem>>, vector<128x128xf32>,
    } else {
    }
    %19 = arith.extui %15 : i1 to i32
    %c0_i32_6 = arith.constant 0 : i32
    %20 = arith.cmpi ne, %19, %c0_i32_6 : i32
    scf.if %20 {
      %c0_26 = arith.constant 0 : index
      %c0_27 = arith.constant 0 : index
      %53 = vector.load %arg8[%c0_26, %c0_27] : memref<256x128xbf16, #tpu.memory_space<vmem>>, vector<256x128xbf16>
      %cst_28 = arith.constant dense<0.000000e+00> : vector<128x128xf32>
      %54 = tpu.matmul %4, %53, %cst_28 {dimension_numbers = #tpu.dot_dimension_numbers<[1], [0], [0], [1], [0, 0, 1, 1], [], []>} : vector<128x256xbf16>, vector<256x128xbf16>, vector<128x128xf32> -> vector<128x128xf32>
      %c0_29 = arith.constant 0 : index
      %c0_30 = arith.constant 0 : index
      %55 = vector.load %arg10[%c0_29, %c0_30] : memref<128x128xf32, #tpu.memory_space<vmem>>, vector<128x128xf32>
      tpu.vector_store %arg10[%c0_29, %c0_30], %54 {strides = array<i32>} : memref<128x128xf32, #tpu.memory_space<vmem>>, vector<128x128xf32>,
    } else {
    }
    %c0_i32_7 = arith.constant 0 : i32
    %21 = arith.cmpi sgt, %arg0, %c0_i32_7 : i32
    %true = arith.constant true
    %22 = arith.xori %15, %true : i1
    %23 = arith.andi %21, %22 : i1
    %24 = arith.extui %23 : i1 to i32
    %c0_i32_8 = arith.constant 0 : i32
    %25 = arith.cmpi ne, %24, %c0_i32_8 : i32
    scf.if %25 {
      %c0_26 = arith.constant 0 : index
      %c0_27 = arith.constant 0 : index
      %53 = vector.load %arg9[%c0_26, %c0_27] : memref<256x128xbf16, #tpu.memory_space<vmem>>, vector<256x128xbf16>
      %cst_28 = arith.constant dense<0.000000e+00> : vector<128x128xf32>
      %54 = tpu.matmul %4, %53, %cst_28 {dimension_numbers = #tpu.dot_dimension_numbers<[1], [0], [0], [1], [0, 0, 1, 1], [], []>} : vector<128x256xbf16>, vector<256x128xbf16>, vector<128x128xf32> -> vector<128x128xf32>
      %c0_29 = arith.constant 0 : index
      %c0_30 = arith.constant 0 : index
      %55 = vector.load %arg10[%c0_29, %c0_30] : memref<128x128xf32, #tpu.memory_space<vmem>>, vector<128x128xf32>
      tpu.vector_store %arg10[%c0_29, %c0_30], %54 {strides = array<i32>} : memref<128x128xf32, #tpu.memory_space<vmem>>, vector<128x128xf32>,
    } else {
    }
    %c0_9 = arith.constant 0 : index
    %c0_10 = arith.constant 0 : index
    %26 = vector.load %arg4[%c0_9, %c0_10] : memref<128x1xf32, #tpu.memory_space<vmem>>, vector<128x1xf32>
    %c0_11 = arith.constant 0 : index
    %c0_12 = arith.constant 0 : index
    %27 = vector.load %arg10[%c0_11, %c0_12] : memref<128x128xf32, #tpu.memory_space<vmem>>, vector<128x128xf32>
    %28 = arith.truncf %27 : vector<128x128xf32> to vector<128x128xbf16>
    %c0_13 = arith.constant 0 : index
    %c0_14 = arith.constant 0 : index
    %c0_15 = arith.constant 0 : index
    %29 = vector.load %arg5[%c0_13, %c0_14, %c0_15] : memref<1x128x128xbf16, #tpu.memory_space<vmem>>, vector<1x128x128xbf16>
    %30 = vector.shape_cast %29 : vector<1x128x128xbf16> to vector<128x128xbf16>
    %cst = arith.constant dense<0.000000e+00> : vector<128x128xf32>
    %31 = tpu.matmul %28, %30, %cst {dimension_numbers = #tpu.dot_dimension_numbers<[1], [0], [0], [1], [0, 0, 1, 1], [], []>} : vector<128x128xbf16>, vector<128x128xbf16>, vector<128x128xf32> -> vector<128x128xf32>
    %32 = vector.broadcast %26 : vector<128x1xf32> to vector<128x128xf32>
    %33 = arith.mulf %32, %31 : vector<128x128xf32>
    %c0_16 = arith.constant 0 : index
    %c0_17 = arith.constant 0 : index
    %c0_18 = arith.constant 0 : index
    %34 = vector.load %arg6[%c0_16, %c0_17, %c0_18] : memref<1x1x128xf32, #tpu.memory_space<vmem>>, vector<1x1x128xf32>
    %35 = vector.shape_cast %34 : vector<1x1x128xf32> to vector<1x128xf32>
    %36 = vector.broadcast %35 : vector<1x128xf32> to vector<128x128xf32>
    %37 = arith.addf %33, %36 : vector<128x128xf32>
    %c2_i32_19 = arith.constant 2 : i32
    %38 = arith.cmpi slt, %arg0, %c2_i32_19 : i32
    %cst_20 = arith.constant 0.000000e+00 : f32
    %39 = vector.broadcast %cst_20 : f32 to vector<128x128xf32>
    %40 = arith.maximumf %37, %39 : vector<128x128xf32>
    %41 = arith.select %38, %40, %37 : vector<128x128xf32>
    %c0_21 = arith.constant 0 : index
    %c0_22 = arith.constant 0 : index
    %42 = vector.load %arg7[%c0_21, %c0_22] : memref<128x128xf32, #tpu.memory_space<vmem>>, vector<128x128xf32>
    tpu.vector_store %arg7[%c0_21, %c0_22], %41 {strides = array<i32>} : memref<128x128xf32, #tpu.memory_space<vmem>>, vector<128x128xf32>,
    %43 = vector.broadcast %26 : vector<128x1xf32> to vector<128x128xf32>
    %44 = arith.mulf %43, %41 : vector<128x128xf32>
    %45 = arith.truncf %44 : vector<128x128xf32> to vector<128x128xbf16>
    %true_23 = arith.constant true
    %46 = arith.xori %15, %true_23 : i1
    %47 = arith.andi %38, %46 : i1
    %48 = arith.extui %47 : i1 to i32
    %c0_i32_24 = arith.constant 0 : i32
    %49 = arith.cmpi ne, %48, %c0_i32_24 : i32
    scf.if %49 {
      %53 = arith.index_cast %1 : i32 to index
      %c0_26 = arith.constant 0 : index
      %54 = vector.load %arg8[%53, %c0_26] : memref<256x128xbf16, #tpu.memory_space<vmem>>, vector<128x128xbf16>
      tpu.vector_store %arg8[%53, %c0_26], %45 {strides = array<i32>} : memref<256x128xbf16, #tpu.memory_space<vmem>>, vector<128x128xbf16>,
    } else {
    }
    %50 = arith.andi %38, %15 : i1
    %51 = arith.extui %50 : i1 to i32
    %c0_i32_25 = arith.constant 0 : i32
    %52 = arith.cmpi ne, %51, %c0_i32_25 : i32
    scf.if %52 {
      %53 = arith.index_cast %1 : i32 to index
      %c0_26 = arith.constant 0 : index
      %54 = vector.load %arg9[%53, %c0_26] : memref<256x128xbf16, #tpu.memory_space<vmem>>, vector<128x128xbf16>
      tpu.vector_store %arg9[%53, %c0_26], %45 {strides = array<i32>} : memref<256x128xbf16, #tpu.memory_space<vmem>>, vector<128x128xbf16>,
    } else {
    }
    return
  }
  func.func @transform_0(%arg0: i32, %arg1: i32) -> (i32, i32) {
    %c0_i32 = arith.constant 0 : i32
    %c0_i32_0 = arith.constant 0 : i32
    %c0_i32_1 = arith.constant 0 : i32
    return %c0_i32, %c0_i32_0 : i32, i32
  }
  func.func @transform_1(%arg0: i32, %arg1: i32) -> (i32, i32) {
    %c0_i32 = arith.constant 0 : i32
    %c0_i32_0 = arith.constant 0 : i32
    %c0_i32_1 = arith.constant 0 : i32
    return %c0_i32, %c0_i32_0 : i32, i32
  }
  func.func @transform_2(%arg0: i32, %arg1: i32) -> (i32, i32) {
    %c0_i32 = arith.constant 0 : i32
    %c0_i32_0 = arith.constant 0 : i32
    return %arg1, %c0_i32 : i32, i32
  }
  func.func @transform_3(%arg0: i32, %arg1: i32) -> (i32, i32, i32) {
    %c0_i32 = arith.constant 0 : i32
    %c0_i32_0 = arith.constant 0 : i32
    %c0_i32_1 = arith.constant 0 : i32
    return %arg0, %c0_i32, %c0_i32_0 : i32, i32, i32
  }
  func.func @transform_4(%arg0: i32, %arg1: i32) -> (i32, i32, i32) {
    %c0_i32 = arith.constant 0 : i32
    %c0_i32_0 = arith.constant 0 : i32
    %c0_i32_1 = arith.constant 0 : i32
    return %arg0, %c0_i32, %c0_i32_0 : i32, i32, i32
  }
  func.func @transform_5(%arg0: i32, %arg1: i32) -> (i32, i32) {
    %c0_i32 = arith.constant 0 : i32
    %c0_i32_0 = arith.constant 0 : i32
    return %arg1, %c0_i32 : i32, i32
  }
}

</mosaic_0001>

<llo_original>
// kernel: base_gnn_forward.1
$region0: #{base_gnn_forward.1}
  #allocation0 [shape = 'u32[]', space=smem, size = 0x4, offset = 0x4, fixed_abs, tag = 'smem constant byte address 0x4 - core index']
  #allocation1 [shape = 'u32[144,128]{1,0:T(1,128)}', space=vmem, size = 0x12000, scoped, tag = 'internal scratch']
  #allocation2 [shape = 'bf16[256,128]{1,0:T(16,128)(2,1)}', space=vmem, size = 0x10000, scoped, tag = 'scratch operand']
  #allocation3 [shape = 'bf16[256,128]{1,0:T(16,128)(2,1)}', space=vmem, size = 0x10000, scoped, tag = 'scratch operand']
  #allocation4 [shape = 'f32[128,128]{1,0:T(8,128)}', space=vmem, size = 0x10000, scoped, tag = 'scratch operand']
  %s0 = inlined_call_operand.vmem [shape: s8[256,256], index: 0, kind: input, shape index: {}]
  %s1 = inlined_call_operand.vmem [shape: bf16[256,128], index: 1, kind: input, shape index: {}]
  %s2 = inlined_call_operand.vmem [shape: f32[256,1], index: 2, kind: input, shape index: {}]
  %s3 = inlined_call_operand.vmem [shape: bf16[3,128,128], index: 3, kind: input, shape index: {}]
  %s4 = inlined_call_operand.vmem [shape: f32[3,1,128], index: 4, kind: input, shape index: {}]
  %s5 = inlined_call_operand.vmem [shape: f32[256,128], index: 5, kind: output, shape index: {}]
  %s6 = sld [smem:[#allocation0]]
  $region73: #{base_gnn_forward.1} parent=0
    _
  %s8 = ssub.s32 1, %s6
  %s9 = scalar_select 0, %s8, %s6
  loop: start=0, step=1, limit=8
  $region2: #{base_gnn_forward.1} parent=0 // loop_pre_header
    _
  $region3: #{base_gnn_forward.1} parent=0 // loop_header
    %s11 = sphi 0, %s15
    %p12 = scmp.ge.s32.totalorder %s11, 8
    %s18 = sphi 0, %s30
    %s19 = sphi 0, %s26
    %s20 = sphi 0, %s18
    %s21 = sphi 0, %s19
    %s22 = sphi 0, %s20
    %s23 = sphi 0, %s21
    %s31 = sphi 0, %s31
    %s33 = sphi 0, %s31
    %s34 = sphi 0, %s33
    %s48 = sphi 0, %s34
    %s52 = sphi 0, %s52
    %s54 = sphi 0, %s52
    %s55 = sphi 0, %s54
    %s69 = sphi 0, %s55
    %s75 = sphi 0, %s77
    %s78 = sphi 0, %s75
    %s79 = sphi 0, %s78
    %s95 = sphi 0, %s79
    %s101 = sphi 0, %s103
    %s104 = sphi 0, %s101
    %s105 = sphi 0, %s104
    %s121 = sphi 0, %s105
    %s127 = sphi 0, %s129
    %s130 = sphi 0, %s127
    %s131 = sphi 0, %s130
    %s147 = sphi 0, %s131
    %s153 = sphi 0, %s155
    %s156 = sphi 0, %s153
    %s157 = sphi 0, %s156
    %s173 = sphi 0, %s157
  $region4: #{base_gnn_forward.1} parent=0 // loop_header_branch
    %14 = sbr.rel (%p12) target = $region8
  $region5: #{base_gnn_forward.1} parent=0 // loop_body
    %s16 = ssub.s32 %s11, 1
    %s17 = ssub.s32 %s11, 2
    %s24 = sadd.s32 1, %s19
    %p25 = scmp.ge.s32.totalorder %s24, 2
    %s26 = scalar_select %p25, 0, %s24
    %s27 = sadd.s32 1, %s18
    %s28 = scalar_select %p25, %s27, %s18
    %p29 = scmp.ge.s32.totalorder %s28, 3
    %s30 = scalar_select %p29, 0, %s28
    %s32 = sadd.s32 %s31, 1
    %p35 = scmp.eq.s32.totalorder %s11, 5
    %p36 = scmp.ne.s32.totalorder %s31, %s33
    %p37 = scmp.eq.s32.totalorder %s11, 0
    %p38 = por %p36, %p37
    %p39 = scmp.ne.s32.totalorder %s31, %s33
    %p40 = scmp.eq.s32.totalorder %s16, 5
    %p41 = por %p39, %p40
    %p42 = scmp.ne.s32.totalorder %s33, %s34
    %p43 = scmp.eq.s32.totalorder %s16, 0
    %p44 = por %p42, %p43
    %p45 = scmp.ne.s32.totalorder %s33, %s34
    %p46 = scmp.eq.s32.totalorder %s17, 5
    %p47 = por %p45, %p46
    %p49 = scmp.ne.s32.totalorder %s34, %s48
    %p50 = scmp.eq.s32.totalorder %s17, 0
    %p51 = por %p49, %p50
    %s53 = sadd.s32 %s52, 1
    %p56 = scmp.eq.s32.totalorder %s11, 5
    %p57 = scmp.ne.s32.totalorder %s52, %s54
    %p58 = scmp.eq.s32.totalorder %s11, 0
    %p59 = por %p57, %p58
    %p60 = scmp.ne.s32.totalorder %s52, %s54
    %p61 = scmp.eq.s32.totalorder %s16, 5
    %p62 = por %p60, %p61
    %p63 = scmp.ne.s32.totalorder %s54, %s55
    %p64 = scmp.eq.s32.totalorder %s16, 0
    %p65 = por %p63, %p64
    %p66 = scmp.ne.s32.totalorder %s54, %s55
    %p67 = scmp.eq.s32.totalorder %s17, 5
    %p68 = por %p66, %p67
    %p70 = scmp.ne.s32.totalorder %s55, %s69
    %p71 = scmp.eq.s32.totalorder %s17, 0
    %p72 = por %p70, %p71
    %s73 = ssub.s32 %s19, %s26
    %p74 = scmp.eq.s32.totalorder %s73, 0
    %s76 = sadd.s32 %s75, 1
    %s77 = scalar_select %p74, %s75, %s76
    %p80 = pneg %p74
    %p81 = scmp.eq.s32.totalorder %s11, 5
    %p82 = por %p80, %p81
    %p83 = scmp.ne.s32.totalorder %s75, %s78
    %p84 = scmp.eq.s32.totalorder %s11, 0
    %p85 = por %p83, %p84
    %p86 = scmp.ne.s32.totalorder %s75, %s78
    %p87 = scmp.eq.s32.totalorder %s16, 5
    %p88 = por %p86, %p87
    %p89 = scmp.ne.s32.totalorder %s78, %s79
    %p90 = scmp.eq.s32.totalorder %s16, 0
    %p91 = por %p89, %p90
    %p92 = scmp.ne.s32.totalorder %s78, %s79
    %p93 = scmp.eq.s32.totalorder %s17, 5
    %p94 = por %p92, %p93
    %p96 = scmp.ne.s32.totalorder %s79, %s95
    %p97 = scmp.eq.s32.totalorder %s17, 0
    %p98 = por %p96, %p97
    %s99 = ssub.s32 %s18, %s30
    %p100 = scmp.eq.s32.totalorder %s99, 0
    %s102 = sadd.s32 %s101, 1
    %s103 = scalar_select %p100, %s101, %s102
    %p106 = pneg %p100
    %p107 = scmp.eq.s32.totalorder %s11, 5
    %p108 = por %p106, %p107
    %p109 = scmp.ne.s32.totalorder %s101, %s104
    %p110 = scmp.eq.s32.totalorder %s11, 0
    %p111 = por %p109, %p110
    %p112 = scmp.ne.s32.totalorder %s101, %s104
    %p113 = scmp.eq.s32.totalorder %s16, 5
    %p114 = por %p112, %p113
    %p115 = scmp.ne.s32.totalorder %s104, %s105
    %p116 = scmp.eq.s32.totalorder %s16, 0
    %p117 = por %p115, %p116
    %p118 = scmp.ne.s32.totalorder %s104, %s105
    %p119 = scmp.eq.s32.totalorder %s17, 5
    %p120 = por %p118, %p119
    %p122 = scmp.ne.s32.totalorder %s105, %s121
    %p123 = scmp.eq.s32.totalorder %s17, 0
    %p124 = por %p122, %p123
    %s125 = ssub.s32 %s18, %s30
    %p126 = scmp.eq.s32.totalorder %s125, 0
    %s128 = sadd.s32 %s127, 1
    %s129 = scalar_select %p126, %s127, %s128
    %p132 = pneg %p126
    %p133 = scmp.eq.s32.totalorder %s11, 5
    %p134 = por %p132, %p133
    %p135 = scmp.ne.s32.totalorder %s127, %s130
    %p136 = scmp.eq.s32.totalorder %s11, 0
    %p137 = por %p135, %p136
    %p138 = scmp.ne.s32.totalorder %s127, %s130
    %p139 = scmp.eq.s32.totalorder %s16, 5
    %p140 = por %p138, %p139
    %p141 = scmp.ne.s32.totalorder %s130, %s131
    %p142 = scmp.eq.s32.totalorder %s16, 0
    %p143 = por %p141, %p142
    %p144 = scmp.ne.s32.totalorder %s130, %s131
    %p145 = scmp.eq.s32.totalorder %s17, 5
    %p146 = por %p144, %p145
    %p148 = scmp.ne.s32.totalorder %s131, %s147
    %p149 = scmp.eq.s32.totalorder %s17, 0
    %p150 = por %p148, %p149
    %s151 = ssub.s32 %s19, %s26
    %p152 = scmp.eq.s32.totalorder %s151, 0
    %s154 = sadd.s32 %s153, 1
    %s155 = scalar_select %p152, %s153, %s154
    %p158 = pneg %p152
    %p159 = scmp.eq.s32.totalorder %s11, 5
    %p160 = por %p158, %p159
    %p161 = scmp.ne.s32.totalorder %s153, %s156
    %p162 = scmp.eq.s32.totalorder %s11, 0
    %p163 = por %p161, %p162
    %p164 = scmp.ne.s32.totalorder %s153, %s156
    %p165 = scmp.eq.s32.totalorder %s16, 5
    %p166 = por %p164, %p165
    %p167 = scmp.ne.s32.totalorder %s156, %s157
    %p168 = scmp.eq.s32.totalorder %s16, 0
    %p169 = por %p167, %p168
    %p170 = scmp.ne.s32.totalorder %s156, %s157
    %p171 = scmp.eq.s32.totalorder %s17, 5
    %p172 = por %p170, %p171
    %p174 = scmp.ne.s32.totalorder %s157, %s173
    %p175 = scmp.eq.s32.totalorder %s17, 0
    %p176 = por %p174, %p175
    %p177 = scmp.le.s32.totalorder 1, %s11
    %p178 = scmp.lt.s32.totalorder %s11, 7
    %p179 = pnand %p177, %p178
    %p180 = pneg %p179
    // Predicated region
    $region9: #{base_gnn_forward.1} parent=5 // pred_check
      _
    $region10: #{base_gnn_forward.1} parent=5 // pred_check_branch
      %182 = sbr.rel (%p179) target = $region12
    $region11: #{base_gnn_forward.1} parent=5 // pred_region
      %s183 = ssub.s32 %s11, 1
      // Predicated region
      $region13: #{base_gnn_forward.1} parent=11 // pred_check
        %p184 = pneg %p44
      $region14: #{base_gnn_forward.1} parent=11 // pred_check_branch
        %186 = sbr.rel (%p184) target = $region16
      $region15: #{base_gnn_forward.1} parent=11 // pred_region
        _
      $region16: #{base_gnn_forward.1} parent=11 // pred_fallthru
        _
      // Predicated region
      $region17: #{base_gnn_forward.1} parent=11 // pred_check
        %p187 = pneg %p65
      $region18: #{base_gnn_forward.1} parent=11 // pred_check_branch
        %189 = sbr.rel (%p187) target = $region20
      $region19: #{base_gnn_forward.1} parent=11 // pred_region
        _
      $region20: #{base_gnn_forward.1} parent=11 // pred_fallthru
        _
    $region12: #{base_gnn_forward.1} parent=5 // pred_fallthru
      _
    %p190 = scmp.lt.s32.totalorder %s11, 6
    // Predicated region
    $region21: #{base_gnn_forward.1} parent=5 // pred_check
      %p191 = pneg %p190
    $region22: #{base_gnn_forward.1} parent=5 // pred_check_branch
      %193 = sbr.rel (%p191) target = $region24
    $region23: #{base_gnn_forward.1} parent=5 // pred_region
      // Predicated region
      $region25: #{base_gnn_forward.1} parent=23 // pred_check
        %p194 = pneg %p85
      $region26: #{base_gnn_forward.1} parent=23 // pred_check_branch
        %196 = sbr.rel (%p194) target = $region28
      $region27: #{base_gnn_forward.1} parent=23 // pred_region
        %s197 = smul.u32 16, %s19
        %p198 = scmp.lt.s32.totalorder %s197, 31
        %s199 = scalar_select %p198, %s197, 31
        %s200 = smul.addr %s199, 8
        %s201 = scalar_lea.vmem %s2, %s200
        %s202 = smul.u32 16, %s19
      $region28: #{base_gnn_forward.1} parent=23 // pred_fallthru
        _
      // Predicated region
      $region29: #{base_gnn_forward.1} parent=23 // pred_check
        %p203 = pneg %p111
      $region30: #{base_gnn_forward.1} parent=23 // pred_check_branch
        %205 = sbr.rel (%p203) target = $region32
      $region31: #{base_gnn_forward.1} parent=23 // pred_region
        %p206 = scmp.lt.s32.totalorder %s18, 2
        %s207 = scalar_select %p206, %s18, 2
        %s208 = smul.addr %s207, 16
        %s209 = smul.addr %s208, 4
        %s210 = scalar_lea.vmem %s3, %s209
      $region32: #{base_gnn_forward.1} parent=23 // pred_fallthru
        _
      // Predicated region
      $region33: #{base_gnn_forward.1} parent=23 // pred_check
        %p211 = pneg %p137
      $region34: #{base_gnn_forward.1} parent=23 // pred_check_branch
        %213 = sbr.rel (%p211) target = $region36
      $region35: #{base_gnn_forward.1} parent=23 // pred_region
        %p214 = scmp.lt.s32.totalorder %s18, 2
        %s215 = scalar_select %p214, %s18, 2
        %s216 = scalar_lea.vmem %s4, %s215
      $region36: #{base_gnn_forward.1} parent=23 // pred_fallthru
        _
    $region24: #{base_gnn_forward.1} parent=5 // pred_fallthru
      _
    %p217 = scmp.le.s32.totalorder 1, %s11
    %p218 = scmp.lt.s32.totalorder %s11, 7
    %p219 = pnand %p217, %p218
    %p220 = pneg %p219
    // Predicated region
    $region37: #{base_gnn_forward.1} parent=5 // pred_check
      _
    $region38: #{base_gnn_forward.1} parent=5 // pred_check_branch
      %222 = sbr.rel (%p219) target = $region40
    $region39: #{base_gnn_forward.1} parent=5 // pred_region
      %s223 = ssub.s32 %s11, 1
      %p224 = pneg %p44
      %p225 = pneg %p41
      %p226 = pneg %p65
      %p227 = pneg %p62
      %s228 = smul.u32 16, %s21
      %p229 = scmp.lt.s32.totalorder %s228, 31
      %s230 = scalar_select %p229, %s228, 31
      %s231 = smul.addr %s230, 8
      %s232 = scalar_lea.vmem %s2, %s231
      %p233 = pneg %p91
      %p234 = pneg %p88
      %p235 = scmp.lt.s32.totalorder %s20, 2
      %s236 = scalar_select %p235, %s20, 2
      %s237 = smul.addr %s236, 16
      %s238 = smul.addr %s237, 4
      %s239 = scalar_lea.vmem %s3, %s238
      %p240 = pneg %p117
      %p241 = pneg %p114
      %p242 = scmp.lt.s32.totalorder %s20, 2
      %s243 = scalar_select %p242, %s20, 2
      %s244 = scalar_lea.vmem %s4, %s243
      %p245 = pneg %p143
      %p246 = pneg %p140
      %p247 = pneg %p169
      %p248 = pneg %p166
      %s249 = smul.u32 16, %s21
      %p250 = scmp.lt.s32.totalorder %s249, 31
      %s251 = scalar_select %p250, %s249, 31
      %s252 = smul.addr %s251, 8
      %s253 = scalar_lea.vmem %s5, %s252
      %s254 = smul.u32 16, %s21
      %p255 = scmp.lt.s32.totalorder %s254, 31
      %s256 = scalar_select %p255, %s254, 31
      %s257 = smul.addr %s256, 8
      %s258 = scalar_lea.vmem %s2, %s257
      %s259 = smul.u32 16, %s21
      %p260 = scmp.lt.s32.totalorder %s20, 2
      %s261 = scalar_select %p260, %s20, 2
      %s262 = smul.addr %s261, 16
      %s263 = smul.addr %s262, 4
      %s264 = scalar_lea.vmem %s3, %s263
      %p265 = scmp.lt.s32.totalorder %s20, 2
      %s266 = scalar_select %p265, %s20, 2
      %s267 = scalar_lea.vmem %s4, %s266
      %s268 = smul.u32 16, %s21
      %p269 = scmp.lt.s32.totalorder %s268, 31
      %s270 = scalar_select %p269, %s268, 31
      %s271 = smul.addr %s270, 8
      %s272 = scalar_lea.vmem %s5, %s271
      %s273 = smul.u32 16, %s21
      %s275 = smul.u32 %s21, 128
      %s276 = sshra.s32 %s275, 5
      %s277 = sand.u32 %s275, 31
      %s278 = smul.u32 %s276, 2
      %s279 = smul.addr %s278, 8
      %s280 = scalar_lea.vmem %s0, %s279
      %v281 = vld [vmem:[%s280] sm:$0xff]
      %v282 = vld [vmem:[%s280 + $0x8] sm:$0xff]
      %v283 = vld [vmem:[%s280 + $0x10] sm:$0xff]
      %v284 = vld [vmem:[%s280 + $0x18] sm:$0xff]
      %v285 = vld [vmem:[%s280 + $0x20] sm:$0xff]
      %v286 = vld [vmem:[%s280 + $0x28] sm:$0xff]
      %v287 = vld [vmem:[%s280 + $0x30] sm:$0xff]
      %v288 = vld [vmem:[%s280 + $0x38] sm:$0xff]
      %v289 = vunpack.c.l.s8.bf16 %v281
      %v290 = vunpack.c.l.s8.bf16 %v282
      %v291 = vunpack.c.h.s8.bf16 %v281
      %v292 = vunpack.c.h.s8.bf16 %v282
      %v293 = vunpack.c.l.s8.bf16 %v283
      %v294 = vunpack.c.l.s8.bf16 %v284
      %v295 = vunpack.c.h.s8.bf16 %v283
      %v296 = vunpack.c.h.s8.bf16 %v284
      %v297 = vunpack.c.l.s8.bf16 %v285
      %v298 = vunpack.c.l.s8.bf16 %v286
      %v299 = vunpack.c.h.s8.bf16 %v285
      %v300 = vunpack.c.h.s8.bf16 %v286
      %v301 = vunpack.c.l.s8.bf16 %v287
      %v302 = vunpack.c.l.s8.bf16 %v288
      %v303 = vunpack.c.h.s8.bf16 %v287
      %v304 = vunpack.c.h.s8.bf16 %v288
      %p305 = scmp.lt.s32.totalorder %s20, 0
      %s306 = ssub.s32 0, %s20
      %s307 = scalar_select %p305, %s306, %s20
      %s308 = sand.u32 %s307, 1
      %s309 = ssub.s32 0, %s308
      %s310 = scalar_select %p305, %s309, %s308
      %p311 = scmp.ne.s32.totalorder %s310, 0
      %p312 = scmp.lt.s32.totalorder %s310, 0
      %p313 = pnand %p312, %p311
      %p314 = pneg %p313
      %s315 = sadd.s32 %s310, 2
      %s316 = scalar_select %p314, %s315, %s310
      %p317 = scmp.eq.s32.totalorder %s316, 1
      %p318 = scmp.eq.s32.totalorder %s20, 0
      // Predicated region
      $region41: #{base_gnn_forward.1} parent=39 // pred_check
        %p319 = pneg %p318
      $region42: #{base_gnn_forward.1} parent=39 // pred_check_branch
        %321 = sbr.rel (%p319) target = $region44
      $region43: #{base_gnn_forward.1} parent=39 // pred_region
        %v322 = vld [vmem:[%s1] sm:$0xf]
        %v323 = vld [vmem:[%s1 + $0x4] sm:$0xf]
        %v324 = vld [vmem:[%s1 + $0x8] sm:$0xf]
        %v325 = vld [vmem:[%s1 + $0xc] sm:$0xf]
        %v326 = vld [vmem:[%s1 + $0x10] sm:$0xf]
        %v327 = vld [vmem:[%s1 + $0x14] sm:$0xf]
        %v328 = vld [vmem:[%s1 + $0x18] sm:$0xf]
        %v329 = vld [vmem:[%s1 + $0x1c] sm:$0xf]
        %v330 = vld [vmem:[%s1 + $0x20] sm:$0xf]
        %v331 = vld [vmem:[%s1 + $0x24] sm:$0xf]
        %v332 = vld [vmem:[%s1 + $0x28] sm:$0xf]
        %v333 = vld [vmem:[%s1 + $0x2c] sm:$0xf]
        %v334 = vld [vmem:[%s1 + $0x30] sm:$0xf]
        %v335 = vld [vmem:[%s1 + $0x34] sm:$0xf]
        %v336 = vld [vmem:[%s1 + $0x38] sm:$0xf]
        %v337 = vld [vmem:[%s1 + $0x3c] sm:$0xf]
        %v338 = vld [vmem:[%s1 + $0x40] sm:$0xf]
        %v339 = vld [vmem:[%s1 + $0x44] sm:$0xf]
        %v340 = vld [vmem:[%s1 + $0x48] sm:$0xf]
        %v341 = vld [vmem:[%s1 + $0x4c] sm:$0xf]
        %v342 = vld [vmem:[%s1 + $0x50] sm:$0xf]
        %v343 = vld [vmem:[%s1 + $0x54] sm:$0xf]
        %v344 = vld [vmem:[%s1 + $0x58] sm:$0xf]
        %v345 = vld [vmem:[%s1 + $0x5c] sm:$0xf]
        %v346 = vld [vmem:[%s1 + $0x60] sm:$0xf]
        %v347 = vld [vmem:[%s1 + $0x64] sm:$0xf]
        %v348 = vld [vmem:[%s1 + $0x68] sm:$0xf]
        %v349 = vld [vmem:[%s1 + $0x6c] sm:$0xf]
        %v350 = vld [vmem:[%s1 + $0x70] sm:$0xf]
        %v351 = vld [vmem:[%s1 + $0x74] sm:$0xf]
        %v352 = vld [vmem:[%s1 + $0x78] sm:$0xf]
        %v353 = vld [vmem:[%s1 + $0x7c] sm:$0xf]
        %v386 = vunpack.c.l.b16 %v322
        %v387 = vunpack.c.l.b16 %v323
        %v388 = vunpack.c.l.b16 %v324
        %v389 = vunpack.c.l.b16 %v325
        %v390 = vunpack.c.l.b16 %v326
        %v391 = vunpack.c.l.b16 %v327
        %v392 = vunpack.c.l.b16 %v328
        %v393 = vunpack.c.l.b16 %v329
        %v394 = vunpack.c.l.b16 %v330
        %v395 = vunpack.c.l.b16 %v331
        %v396 = vunpack.c.l.b16 %v332
        %v397 = vunpack.c.l.b16 %v333
        %v398 = vunpack.c.l.b16 %v334
        %v399 = vunpack.c.l.b16 %v335
        %v400 = vunpack.c.l.b16 %v336
        %v401 = vunpack.c.l.b16 %v337
        %v402 = vunpack.c.l.b16 %v338
        %v403 = vunpack.c.l.b16 %v339
        %v404 = vunpack.c.l.b16 %v340
        %v405 = vunpack.c.l.b16 %v341
        %v406 = vunpack.c.l.b16 %v342
        %v407 = vunpack.c.l.b16 %v343
        %v408 = vunpack.c.l.b16 %v344
        %v409 = vunpack.c.l.b16 %v345
        %v410 = vunpack.c.l.b16 %v346
        %v411 = vunpack.c.l.b16 %v347
        %v412 = vunpack.c.l.b16 %v348
        %v413 = vunpack.c.l.b16 %v349
        %v414 = vunpack.c.l.b16 %v350
        %v415 = vunpack.c.l.b16 %v351
        %v416 = vunpack.c.l.b16 %v352
        %v417 = vunpack.c.l.b16 %v353
        %v418 = vpack.c.b16 %v387, %v386
        %v419 = vpack.c.b16 %v389, %v388
        %v420 = vpack.c.b16 %v391, %v390
        %v421 = vpack.c.b16 %v393, %v392
        %v422 = vpack.c.b16 %v395, %v394
        %v423 = vpack.c.b16 %v397, %v396
        %v424 = vpack.c.b16 %v399, %v398
        %v425 = vpack.c.b16 %v401, %v400
        %v426 = vpack.c.b16 %v403, %v402
        %v427 = vpack.c.b16 %v405, %v404
        %v428 = vpack.c.b16 %v407, %v406
        %v429 = vpack.c.b16 %v409, %v408
        %v430 = vpack.c.b16 %v411, %v410
        %v431 = vpack.c.b16 %v413, %v412
        %v432 = vpack.c.b16 %v415, %v414
        %v433 = vpack.c.b16 %v417, %v416
        %450 = vmatprep.subr.bf16.mxu0 0
        %451 = vmatpush1.bf16.msra.mxu0 %v418
        %452 = vmatprep.subr.bf16.mxu0 0
        %453 = vmatpush1.bf16.msra.mxu0 %v419
        %454 = vmatprep.subr.bf16.mxu0 0
        %455 = vmatpush1.bf16.msra.mxu0 %v420
        %456 = vmatprep.subr.bf16.mxu0 0
        %457 = vmatpush1.bf16.msra.mxu0 %v421
        %458 = vmatprep.subr.bf16.mxu0 0
        %459 = vmatpush1.bf16.msra.mxu0 %v422
        %460 = vmatprep.subr.bf16.mxu0 0
        %461 = vmatpush1.bf16.msra.mxu0 %v423
        %462 = vmatprep.subr.bf16.mxu0 0
        %463 = vmatpush1.bf16.msra.mxu0 %v424
        %464 = vmatprep.subr.bf16.mxu0 0
        %465 = vmatpush1.bf16.msra.mxu0 %v425
        %466 = vmatprep.subr.bf16.mxu0 0
        %467 = vmatpush1.bf16.msra.mxu0 %v426
        %468 = vmatprep.subr.bf16.mxu0 0
        %469 = vmatpush1.bf16.msra.mxu0 %v427
        %470 = vmatprep.subr.bf16.mxu0 0
        %471 = vmatpush1.bf16.msra.mxu0 %v428
        %472 = vmatprep.subr.bf16.mxu0 0
        %473 = vmatpush1.bf16.msra.mxu0 %v429
        %474 = vmatprep.subr.bf16.mxu0 0
        %475 = vmatpush1.bf16.msra.mxu0 %v430
        %476 = vmatprep.subr.bf16.mxu0 0
        %477 = vmatpush1.bf16.msra.mxu0 %v431
        %478 = vmatprep.subr.bf16.mxu0 0
        %479 = vmatpush1.bf16.msra.mxu0 %v432
        %480 = vmatprep.subr.bf16.mxu0 0
        %481 = vmatpush1.bf16.msra.mxu0 %v433
        %482 = vmatprep.mubr.bf16.mxu0 %v290
        %483 = vmatmul.mubr.bf16.gmra.mrb[0].mxu0 %v289
        %v484 = vpop.f32.mrb[0].mxu0
        %v485 = vadd.f32 0.0, %v484
        %v486 = vpop.f32.mrb[0].mxu0
        %v487 = vpop.f32.mrb[0].mxu0
        %v488 = vadd.f32 0.0, %v487
        %v489 = vpop.f32.mrb[0].mxu0
        %490 = vmatprep.mubr.bf16.mxu0 %v292
        %491 = vmatmul.mubr.bf16.gmra.mrb[0].mxu0 %v291
        %v492 = vpop.f32.mrb[0].mxu0
        %v493 = vadd.f32 0.0, %v492
        %v494 = vpop.f32.mrb[0].mxu0
        %v495 = vpop.f32.mrb[0].mxu0
        %v496 = vadd.f32 0.0, %v495
        %v497 = vpop.f32.mrb[0].mxu0
        %498 = vmatprep.mubr.bf16.mxu0 %v294
        %499 = vmatmul.mubr.bf16.gmra.mrb[0].mxu0 %v293
        %v500 = vpop.f32.mrb[0].mxu0
        %v501 = vadd.f32 0.0, %v500
        %v502 = vpop.f32.mrb[0].mxu0
        %v503 = vpop.f32.mrb[0].mxu0
        %v504 = vadd.f32 0.0, %v503
        %v505 = vpop.f32.mrb[0].mxu0
        %506 = vmatprep.mubr.bf16.mxu0 %v296
        %507 = vmatmul.mubr.bf16.gmra.mrb[0].mxu0 %v295
        %v508 = vpop.f32.mrb[0].mxu0
        %v509 = vadd.f32 0.0, %v508
        %v510 = vpop.f32.mrb[0].mxu0
        %v511 = vpop.f32.mrb[0].mxu0
        %v512 = vadd.f32 0.0, %v511
        %v513 = vpop.f32.mrb[0].mxu0
        %514 = vmatprep.mubr.bf16.mxu0 %v298
        %515 = vmatmul.mubr.bf16.gmra.mrb[0].mxu0 %v297
        %v516 = vpop.f32.mrb[0].mxu0
        %v517 = vadd.f32 0.0, %v516
        %v518 = vpop.f32.mrb[0].mxu0
        %v519 = vpop.f32.mrb[0].mxu0
        %v520 = vadd.f32 0.0, %v519
        %v521 = vpop.f32.mrb[0].mxu0
        %522 = vmatprep.mubr.bf16.mxu0 %v300
        %523 = vmatmul.mubr.bf16.gmra.mrb[0].mxu0 %v299
        %v524 = vpop.f32.mrb[0].mxu0
        %v525 = vadd.f32 0.0, %v524
        %v526 = vpop.f32.mrb[0].mxu0
        %v527 = vpop.f32.mrb[0].mxu0
        %v528 = vadd.f32 0.0, %v527
        %v529 = vpop.f32.mrb[0].mxu0
        %530 = vmatprep.mubr.bf16.mxu0 %v302
        %531 = vmatmul.mubr.bf16.gmra.mrb[0].mxu0 %v301
        %v532 = vpop.f32.mrb[0].mxu0
        %v533 = vadd.f32 0.0, %v532
        %v534 = vpop.f32.mrb[0].mxu0
        %v535 = vpop.f32.mrb[0].mxu0
        %v536 = vadd.f32 0.0, %v535
        %v537 = vpop.f32.mrb[0].mxu0
        %538 = vmatprep.mubr.bf16.mxu0 %v304
        %539 = vmatmul.mubr.bf16.gmra.mrb[0].mxu0 %v303
        %v540 = vpop.f32.mrb[0].mxu0
        %v541 = vadd.f32 0.0, %v540
        %v542 = vpop.f32.mrb[0].mxu0
        %v543 = vpop.f32.mrb[0].mxu0
        %v544 = vadd.f32 0.0, %v543
        %v545 = vpop.f32.mrb[0].mxu0
        %546 = vdwg.mxu0
        %547 = vst [vmem:[#allocation4] sm:$0xff] %v485
        %548 = vst [vmem:[#allocation4 + $0x8] sm:$0xff] %v488
        %549 = vst [vmem:[#allocation4 + $0x10] sm:$0xff] %v493
        %550 = vst [vmem:[#allocation4 + $0x18] sm:$0xff] %v496
        %551 = vst [vmem:[#allocation4 + $0x20] sm:$0xff] %v501
        %552 = vst [vmem:[#allocation4 + $0x28] sm:$0xff] %v504
        %553 = vst [vmem:[#allocation4 + $0x30] sm:$0xff] %v509
        %554 = vst [vmem:[#allocation4 + $0x38] sm:$0xff] %v512
        %555 = vst [vmem:[#allocation4 + $0x40] sm:$0xff] %v517
        %556 = vst [vmem:[#allocation4 + $0x48] sm:$0xff] %v520
        %557 = vst [vmem:[#allocation4 + $0x50] sm:$0xff] %v525
        %558 = vst [vmem:[#allocation4 + $0x58] sm:$0xff] %v528
        %559 = vst [vmem:[#allocation4 + $0x60] sm:$0xff] %v533
        %560 = vst [vmem:[#allocation4 + $0x68] sm:$0xff] %v536
        %561 = vst [vmem:[#allocation4 + $0x70] sm:$0xff] %v541
        %562 = vst [vmem:[#allocation4 + $0x78] sm:$0xff] %v544
      $region44: #{base_gnn_forward.1} parent=39 // pred_fallthru
        _
      // Predicated region
      $region45: #{base_gnn_forward.1} parent=39 // pred_check
        %p563 = pneg %p317
      $region46: #{base_gnn_forward.1} parent=39 // pred_check_branch
        %565 = sbr.rel (%p563) target = $region48
      $region47: #{base_gnn_forward.1} parent=39 // pred_region
        %v566 = vld [vmem:[#allocation2] sm:$0xff]
        %v567 = vld [vmem:[#allocation2 + $0x8] sm:$0xff]
        %v568 = vld [vmem:[#allocation2 + $0x10] sm:$0xff]
        %v569 = vld [vmem:[#allocation2 + $0x18] sm:$0xff]
        %v570 = vld [vmem:[#allocation2 + $0x20] sm:$0xff]
        %v571 = vld [vmem:[#allocation2 + $0x28] sm:$0xff]
        %v572 = vld [vmem:[#allocation2 + $0x30] sm:$0xff]
        %v573 = vld [vmem:[#allocation2 + $0x38] sm:$0xff]
        %v574 = vld [vmem:[#allocation2 + $0x40] sm:$0xff]
        %v575 = vld [vmem:[#allocation2 + $0x48] sm:$0xff]
        %v576 = vld [vmem:[#allocation2 + $0x50] sm:$0xff]
        %v577 = vld [vmem:[#allocation2 + $0x58] sm:$0xff]
        %v578 = vld [vmem:[#allocation2 + $0x60] sm:$0xff]
        %v579 = vld [vmem:[#allocation2 + $0x68] sm:$0xff]
        %v580 = vld [vmem:[#allocation2 + $0x70] sm:$0xff]
        %v581 = vld [vmem:[#allocation2 + $0x78] sm:$0xff]
        %582 = vmatprep.subr.bf16.mxu0 0
        %583 = vmatpush1.bf16.msra.mxu0 %v566
        %584 = vmatprep.subr.bf16.mxu0 0
        %585 = vmatpush1.bf16.msra.mxu0 %v567
        %586 = vmatprep.subr.bf16.mxu0 0
        %587 = vmatpush1.bf16.msra.mxu0 %v568
        %588 = vmatprep.subr.bf16.mxu0 0
        %589 = vmatpush1.bf16.msra.mxu0 %v569
        %590 = vmatprep.subr.bf16.mxu0 0
        %591 = vmatpush1.bf16.msra.mxu0 %v570
        %592 = vmatprep.subr.bf16.mxu0 0
        %593 = vmatpush1.bf16.msra.mxu0 %v571
        %594 = vmatprep.subr.bf16.mxu0 0
        %595 = vmatpush1.bf16.msra.mxu0 %v572
        %596 = vmatprep.subr.bf16.mxu0 0
        %597 = vmatpush1.bf16.msra.mxu0 %v573
        %598 = vmatprep.subr.bf16.mxu0 0
        %599 = vmatpush1.bf16.msra.mxu0 %v574
        %600 = vmatprep.subr.bf16.mxu0 0
        %601 = vmatpush1.bf16.msra.mxu0 %v575
        %602 = vmatprep.subr.bf16.mxu0 0
        %603 = vmatpush1.bf16.msra.mxu0 %v576
        %604 = vmatprep.subr.bf16.mxu0 0
        %605 = vmatpush1.bf16.msra.mxu0 %v577
        %606 = vmatprep.subr.bf16.mxu0 0
        %607 = vmatpush1.bf16.msra.mxu0 %v578
        %608 = vmatprep.subr.bf16.mxu0 0
        %609 = vmatpush1.bf16.msra.mxu0 %v579
        %610 = vmatprep.subr.bf16.mxu0 0
        %611 = vmatpush1.bf16.msra.mxu0 %v580
        %612 = vmatprep.subr.bf16.mxu0 0
        %613 = vmatpush1.bf16.msra.mxu0 %v581
        %614 = vmatprep.mubr.bf16.mxu0 %v290
        %615 = vmatmul.mubr.bf16.gmra.mrb[0].mxu0 %v289
        %v616 = vpop.f32.mrb[0].mxu0
        %v617 = vadd.f32 0.0, %v616
        %v618 = vpop.f32.mrb[0].mxu0
        %v619 = vpop.f32.mrb[0].mxu0
        %v620 = vadd.f32 0.0, %v619
        %v621 = vpop.f32.mrb[0].mxu0
        %622 = vmatprep.mubr.bf16.mxu0 %v292
        %623 = vmatmul.mubr.bf16.gmra.mrb[0].mxu0 %v291
        %v624 = vpop.f32.mrb[0].mxu0
        %v625 = vadd.f32 0.0, %v624
        %v626 = vpop.f32.mrb[0].mxu0
        %v627 = vpop.f32.mrb[0].mxu0
        %v628 = vadd.f32 0.0, %v627
        %v629 = vpop.f32.mrb[0].mxu0
        %630 = vmatprep.mubr.bf16.mxu0 %v294
        %631 = vmatmul.mubr.bf16.gmra.mrb[0].mxu0 %v293
        %v632 = vpop.f32.mrb[0].mxu0
        %v633 = vadd.f32 0.0, %v632
        %v634 = vpop.f32.mrb[0].mxu0
        %v635 = vpop.f32.mrb[0].mxu0
        %v636 = vadd.f32 0.0, %v635
        %v637 = vpop.f32.mrb[0].mxu0
        %638 = vmatprep.mubr.bf16.mxu0 %v296
        %639 = vmatmul.mubr.bf16.gmra.mrb[0].mxu0 %v295
        %v640 = vpop.f32.mrb[0].mxu0
        %v641 = vadd.f32 0.0, %v640
        %v642 = vpop.f32.mrb[0].mxu0
        %v643 = vpop.f32.mrb[0].mxu0
        %v644 = vadd.f32 0.0, %v643
        %v645 = vpop.f32.mrb[0].mxu0
        %646 = vmatprep.mubr.bf16.mxu0 %v298
        %647 = vmatmul.mubr.bf16.gmra.mrb[0].mxu0 %v297
        %v648 = vpop.f32.mrb[0].mxu0
        %v649 = vadd.f32 0.0, %v648
        %v650 = vpop.f32.mrb[0].mxu0
        %v651 = vpop.f32.mrb[0].mxu0
        %v652 = vadd.f32 0.0, %v651
        %v653 = vpop.f32.mrb[0].mxu0
        %654 = vmatprep.mubr.bf16.mxu0 %v300
        %655 = vmatmul.mubr.bf16.gmra.mrb[0].mxu0 %v299
        %v656 = vpop.f32.mrb[0].mxu0
        %v657 = vadd.f32 0.0, %v656
        %v658 = vpop.f32.mrb[0].mxu0
        %v659 = vpop.f32.mrb[0].mxu0
        %v660 = vadd.f32 0.0, %v659
        %v661 = vpop.f32.mrb[0].mxu0
        %662 = vmatprep.mubr.bf16.mxu0 %v302
        %663 = vmatmul.mubr.bf16.gmra.mrb[0].mxu0 %v301
        %v664 = vpop.f32.mrb[0].mxu0
        %v665 = vadd.f32 0.0, %v664
        %v666 = vpop.f32.mrb[0].mxu0
        %v667 = vpop.f32.mrb[0].mxu0
        %v668 = vadd.f32 0.0, %v667
        %v669 = vpop.f32.mrb[0].mxu0
        %670 = vmatprep.mubr.bf16.mxu0 %v304
        %671 = vmatmul.mubr.bf16.gmra.mrb[0].mxu0 %v303
        %v672 = vpop.f32.mrb[0].mxu0
        %v673 = vadd.f32 0.0, %v672
        %v674 = vpop.f32.mrb[0].mxu0
        %v675 = vpop.f32.mrb[0].mxu0
        %v676 = vadd.f32 0.0, %v675
        %v677 = vpop.f32.mrb[0].mxu0
        %678 = vdwg.mxu0
        %679 = vst [vmem:[#allocation4] sm:$0xff] %v617
        %680 = vst [vmem:[#allocation4 + $0x8] sm:$0xff] %v620
        %681 = vst [vmem:[#allocation4 + $0x10] sm:$0xff] %v625
        %682 = vst [vmem:[#allocation4 + $0x18] sm:$0xff] %v628
        %683 = vst [vmem:[#allocation4 + $0x20] sm:$0xff] %v633
        %684 = vst [vmem:[#allocation4 + $0x28] sm:$0xff] %v636
        %685 = vst [vmem:[#allocation4 + $0x30] sm:$0xff] %v641
        %686 = vst [vmem:[#allocation4 + $0x38] sm:$0xff] %v644
        %687 = vst [vmem:[#allocation4 + $0x40] sm:$0xff] %v649
        %688 = vst [vmem:[#allocation4 + $0x48] sm:$0xff] %v652
        %689 = vst [vmem:[#allocation4 + $0x50] sm:$0xff] %v657
        %690 = vst [vmem:[#allocation4 + $0x58] sm:$0xff] %v660
        %691 = vst [vmem:[#allocation4 + $0x60] sm:$0xff] %v665
        %692 = vst [vmem:[#allocation4 + $0x68] sm:$0xff] %v668
        %693 = vst [vmem:[#allocation4 + $0x70] sm:$0xff] %v673
        %694 = vst [vmem:[#allocation4 + $0x78] sm:$0xff] %v676
      $region48: #{base_gnn_forward.1} parent=39 // pred_fallthru
        _
      %p695 = scmp.gt.s32.totalorder %s20, 0
      %p696 = scmp.ne.s32.totalorder %s316, 1
      %p697 = pnand %p695, %p696
      %p698 = pneg %p697
      // Predicated region
      $region49: #{base_gnn_forward.1} parent=39 // pred_check
        _
      $region50: #{base_gnn_forward.1} parent=39 // pred_check_branch
        %700 = sbr.rel (%p697) target = $region52
      $region51: #{base_gnn_forward.1} parent=39 // pred_region
        %v701 = vld [vmem:[#allocation3] sm:$0xff]
        %v702 = vld [vmem:[#allocation3 + $0x8] sm:$0xff]
        %v703 = vld [vmem:[#allocation3 + $0x10] sm:$0xff]
        %v704 = vld [vmem:[#allocation3 + $0x18] sm:$0xff]
        %v705 = vld [vmem:[#allocation3 + $0x20] sm:$0xff]
        %v706 = vld [vmem:[#allocation3 + $0x28] sm:$0xff]
        %v707 = vld [vmem:[#allocation3 + $0x30] sm:$0xff]
        %v708 = vld [vmem:[#allocation3 + $0x38] sm:$0xff]
        %v709 = vld [vmem:[#allocation3 + $0x40] sm:$0xff]
        %v710 = vld [vmem:[#allocation3 + $0x48] sm:$0xff]
        %v711 = vld [vmem:[#allocation3 + $0x50] sm:$0xff]
        %v712 = vld [vmem:[#allocation3 + $0x58] sm:$0xff]
        %v713 = vld [vmem:[#allocation3 + $0x60] sm:$0xff]
        %v714 = vld [vmem:[#allocation3 + $0x68] sm:$0xff]
        %v715 = vld [vmem:[#allocation3 + $0x70] sm:$0xff]
        %v716 = vld [vmem:[#allocation3 + $0x78] sm:$0xff]
        %717 = vmatprep.subr.bf16.mxu0 0
        %718 = vmatpush1.bf16.msra.mxu0 %v701
        %719 = vmatprep.subr.bf16.mxu0 0
        %720 = vmatpush1.bf16.msra.mxu0 %v702
        %721 = vmatprep.subr.bf16.mxu0 0
        %722 = vmatpush1.bf16.msra.mxu0 %v703
        %723 = vmatprep.subr.bf16.mxu0 0
        %724 = vmatpush1.bf16.msra.mxu0 %v704
        %725 = vmatprep.subr.bf16.mxu0 0
        %726 = vmatpush1.bf16.msra.mxu0 %v705
        %727 = vmatprep.subr.bf16.mxu0 0
        %728 = vmatpush1.bf16.msra.mxu0 %v706
        %729 = vmatprep.subr.bf16.mxu0 0
        %730 = vmatpush1.bf16.msra.mxu0 %v707
        %731 = vmatprep.subr.bf16.mxu0 0
        %732 = vmatpush1.bf16.msra.mxu0 %v708
        %733 = vmatprep.subr.bf16.mxu0 0
        %734 = vmatpush1.bf16.msra.mxu0 %v709
        %735 = vmatprep.subr.bf16.mxu0 0
        %736 = vmatpush1.bf16.msra.mxu0 %v710
        %737 = vmatprep.subr.bf16.mxu0 0
        %738 = vmatpush1.bf16.msra.mxu0 %v711
        %739 = vmatprep.subr.bf16.mxu0 0
        %740 = vmatpush1.bf16.msra.mxu0 %v712
        %741 = vmatprep.subr.bf16.mxu0 0
        %742 = vmatpush1.bf16.msra.mxu0 %v713
        %743 = vmatprep.subr.bf16.mxu0 0
        %744 = vmatpush1.bf16.msra.mxu0 %v714
        %745 = vmatprep.subr.bf16.mxu0 0
        %746 = vmatpush1.bf16.msra.mxu0 %v715
        %747 = vmatprep.subr.bf16.mxu0 0
        %748 = vmatpush1.bf16.msra.mxu0 %v716
        %749 = vmatprep.mubr.bf16.mxu0 %v290
        %750 = vmatmul.mubr.bf16.gmra.mrb[0].mxu0 %v289
        %v751 = vpop.f32.mrb[0].mxu0
        %v752 = vadd.f32 0.0, %v751
        %v753 = vpop.f32.mrb[0].mxu0
        %v754 = vpop.f32.mrb[0].mxu0
        %v755 = vadd.f32 0.0, %v754
        %v756 = vpop.f32.mrb[0].mxu0
        %757 = vmatprep.mubr.bf16.mxu0 %v292
        %758 = vmatmul.mubr.bf16.gmra.mrb[0].mxu0 %v291
        %v759 = vpop.f32.mrb[0].mxu0
        %v760 = vadd.f32 0.0, %v759
        %v761 = vpop.f32.mrb[0].mxu0
        %v762 = vpop.f32.mrb[0].mxu0
        %v763 = vadd.f32 0.0, %v762
        %v764 = vpop.f32.mrb[0].mxu0
        %765 = vmatprep.mubr.bf16.mxu0 %v294
        %766 = vmatmul.mubr.bf16.gmra.mrb[0].mxu0 %v293
        %v767 = vpop.f32.mrb[0].mxu0
        %v768 = vadd.f32 0.0, %v767
        %v769 = vpop.f32.mrb[0].mxu0
        %v770 = vpop.f32.mrb[0].mxu0
        %v771 = vadd.f32 0.0, %v770
        %v772 = vpop.f32.mrb[0].mxu0
        %773 = vmatprep.mubr.bf16.mxu0 %v296
        %774 = vmatmul.mubr.bf16.gmra.mrb[0].mxu0 %v295
        %v775 = vpop.f32.mrb[0].mxu0
        %v776 = vadd.f32 0.0, %v775
        %v777 = vpop.f32.mrb[0].mxu0
        %v778 = vpop.f32.mrb[0].mxu0
        %v779 = vadd.f32 0.0, %v778
        %v780 = vpop.f32.mrb[0].mxu0
        %781 = vmatprep.mubr.bf16.mxu0 %v298
        %782 = vmatmul.mubr.bf16.gmra.mrb[0].mxu0 %v297
        %v783 = vpop.f32.mrb[0].mxu0
        %v784 = vadd.f32 0.0, %v783
        %v785 = vpop.f32.mrb[0].mxu0
        %v786 = vpop.f32.mrb[0].mxu0
        %v787 = vadd.f32 0.0, %v786
        %v788 = vpop.f32.mrb[0].mxu0
        %789 = vmatprep.mubr.bf16.mxu0 %v300
        %790 = vmatmul.mubr.bf16.gmra.mrb[0].mxu0 %v299
        %v791 = vpop.f32.mrb[0].mxu0
        %v792 = vadd.f32 0.0, %v791
        %v793 = vpop.f32.mrb[0].mxu0
        %v794 = vpop.f32.mrb[0].mxu0
        %v795 = vadd.f32 0.0, %v794
        %v796 = vpop.f32.mrb[0].mxu0
        %797 = vmatprep.mubr.bf16.mxu0 %v302
        %798 = vmatmul.mubr.bf16.gmra.mrb[0].mxu0 %v301
        %v799 = vpop.f32.mrb[0].mxu0
        %v800 = vadd.f32 0.0, %v799
        %v801 = vpop.f32.mrb[0].mxu0
        %v802 = vpop.f32.mrb[0].mxu0
        %v803 = vadd.f32 0.0, %v802
        %v804 = vpop.f32.mrb[0].mxu0
        %805 = vmatprep.mubr.bf16.mxu0 %v304
        %806 = vmatmul.mubr.bf16.gmra.mrb[0].mxu0 %v303
        %v807 = vpop.f32.mrb[0].mxu0
        %v808 = vadd.f32 0.0, %v807
        %v809 = vpop.f32.mrb[0].mxu0
        %v810 = vpop.f32.mrb[0].mxu0
        %v811 = vadd.f32 0.0, %v810
        %v812 = vpop.f32.mrb[0].mxu0
        %813 = vdwg.mxu0
        %814 = vst [vmem:[#allocation4] sm:$0xff] %v752
        %815 = vst [vmem:[#allocation4 + $0x8] sm:$0xff] %v755
        %816 = vst [vmem:[#allocation4 + $0x10] sm:$0xff] %v760
        %817 = vst [vmem:[#allocation4 + $0x18] sm:$0xff] %v763
        %818 = vst [vmem:[#allocation4 + $0x20] sm:$0xff] %v768
        %819 = vst [vmem:[#allocation4 + $0x28] sm:$0xff] %v771
        %820 = vst [vmem:[#allocation4 + $0x30] sm:$0xff] %v776
        %821 = vst [vmem:[#allocation4 + $0x38] sm:$0xff] %v779
        %822 = vst [vmem:[#allocation4 + $0x40] sm:$0xff] %v784
        %823 = vst [vmem:[#allocation4 + $0x48] sm:$0xff] %v787
        %824 = vst [vmem:[#allocation4 + $0x50] sm:$0xff] %v792
        %825 = vst [vmem:[#allocation4 + $0x58] sm:$0xff] %v795
        %826 = vst [vmem:[#allocation4 + $0x60] sm:$0xff] %v800
        %827 = vst [vmem:[#allocation4 + $0x68] sm:$0xff] %v803
        %828 = vst [vmem:[#allocation4 + $0x70] sm:$0xff] %v808
        %829 = vst [vmem:[#allocation4 + $0x78] sm:$0xff] %v811
      $region52: #{base_gnn_forward.1} parent=39 // pred_fallthru
        _
      %v830 = vld [vmem:[%s258] sm:$0xff]
      %v831 = vld [vmem:[%s258 + $0x8] sm:$0xff]
      %v832 = vld [vmem:[%s258 + $0x10] sm:$0xff]
      %v833 = vld [vmem:[%s258 + $0x18] sm:$0xff]
      %v834 = vld [vmem:[%s258 + $0x20] sm:$0xff]
      %v835 = vld [vmem:[%s258 + $0x28] sm:$0xff]
      %v836 = vld [vmem:[%s258 + $0x30] sm:$0xff]
      %v837 = vld [vmem:[%s258 + $0x38] sm:$0xff]
      %v838 = vld [vmem:[%s258 + $0x40] sm:$0xff]
      %v839 = vld [vmem:[%s258 + $0x48] sm:$0xff]
      %v840 = vld [vmem:[%s258 + $0x50] sm:$0xff]
      %v841 = vld [vmem:[%s258 + $0x58] sm:$0xff]
      %v842 = vld [vmem:[%s258 + $0x60] sm:$0xff]
      %v843 = vld [vmem:[%s258 + $0x68] sm:$0xff]
      %v844 = vld [vmem:[%s258 + $0x70] sm:$0xff]
      %v845 = vld [vmem:[%s258 + $0x78] sm:$0xff]
      %v846 = vld [vmem:[#allocation4] sm:$0xff]
      %v847 = vld [vmem:[#allocation4 + $0x8] sm:$0xff]
      %v848 = vld [vmem:[#allocation4 + $0x10] sm:$0xff]
      %v849 = vld [vmem:[#allocation4 + $0x18] sm:$0xff]
      %v850 = vld [vmem:[#allocation4 + $0x20] sm:$0xff]
      %v851 = vld [vmem:[#allocation4 + $0x28] sm:$0xff]
      %v852 = vld [vmem:[#allocation4 + $0x30] sm:$0xff]
      %v853 = vld [vmem:[#allocation4 + $0x38] sm:$0xff]
      %v854 = vld [vmem:[#allocation4 + $0x40] sm:$0xff]
      %v855 = vld [vmem:[#allocation4 + $0x48] sm:$0xff]
      %v856 = vld [vmem:[#allocation4 + $0x50] sm:$0xff]
      %v857 = vld [vmem:[#allocation4 + $0x58] sm:$0xff]
      %v858 = vld [vmem:[#allocation4 + $0x60] sm:$0xff]
      %v859 = vld [vmem:[#allocation4 + $0x68] sm:$0xff]
      %v860 = vld [vmem:[#allocation4 + $0x70] sm:$0xff]
      %v861 = vld [vmem:[#allocation4 + $0x78] sm:$0xff]
      %v862 = vpack.c.bf16 %v847, %v846
      %v863 = vpack.c.bf16 %v849, %v848
      %v864 = vpack.c.bf16 %v851, %v850
      %v865 = vpack.c.bf16 %v853, %v852
      %v866 = vpack.c.bf16 %v855, %v854
      %v867 = vpack.c.bf16 %v857, %v856
      %v868 = vpack.c.bf16 %v859, %v858
      %v869 = vpack.c.bf16 %v861, %v860
      %v870 = vld [vmem:[%s264] sm:$0xf]
      %v871 = vld [vmem:[%s264 + $0x4] sm:$0xf]
      %v872 = vld [vmem:[%s264 + $0x8] sm:$0xf]
      %v873 = vld [vmem:[%s264 + $0xc] sm:$0xf]
      %v874 = vld [vmem:[%s264 + $0x10] sm:$0xf]
      %v875 = vld [vmem:[%s264 + $0x14] sm:$0xf]
      %v876 = vld [vmem:[%s264 + $0x18] sm:$0xf]
      %v877 = vld [vmem:[%s264 + $0x1c] sm:$0xf]
      %v878 = vld [vmem:[%s264 + $0x20] sm:$0xf]
      %v879 = vld [vmem:[%s264 + $0x24] sm:$0xf]
      %v880 = vld [vmem:[%s264 + $0x28] sm:$0xf]
      %v881 = vld [vmem:[%s264 + $0x2c] sm:$0xf]
      %v882 = vld [vmem:[%s264 + $0x30] sm:$0xf]
      %v883 = vld [vmem:[%s264 + $0x34] sm:$0xf]
      %v884 = vld [vmem:[%s264 + $0x38] sm:$0xf]
      %v885 = vld [vmem:[%s264 + $0x3c] sm:$0xf]
      %v902 = vunpack.c.l.b16 %v870
      %v903 = vunpack.c.l.b16 %v871
      %v904 = vunpack.c.l.b16 %v872
      %v905 = vunpack.c.l.b16 %v873
      %v906 = vunpack.c.l.b16 %v874
      %v907 = vunpack.c.l.b16 %v875
      %v908 = vunpack.c.l.b16 %v876
      %v909 = vunpack.c.l.b16 %v877
      %v910 = vunpack.c.l.b16 %v878
      %v911 = vunpack.c.l.b16 %v879
      %v912 = vunpack.c.l.b16 %v880
      %v913 = vunpack.c.l.b16 %v881
      %v914 = vunpack.c.l.b16 %v882
      %v915 = vunpack.c.l.b16 %v883
      %v916 = vunpack.c.l.b16 %v884
      %v917 = vunpack.c.l.b16 %v885
      %v918 = vpack.c.b16 %v903, %v902
      %v919 = vpack.c.b16 %v905, %v904
      %v920 = vpack.c.b16 %v907, %v906
      %v921 = vpack.c.b16 %v909, %v908
      %v922 = vpack.c.b16 %v911, %v910
      %v923 = vpack.c.b16 %v913, %v912
      %v924 = vpack.c.b16 %v915, %v914
      %v925 = vpack.c.b16 %v917, %v916
      %934 = vmatprep.subr.bf16.mxu0 0
      %935 = vmatpush1.bf16.msra.mxu0 %v918
      %936 = vmatprep.subr.bf16.mxu0 0
      %937 = vmatpush1.bf16.msra.mxu0 %v919
      %938 = vmatprep.subr.bf16.mxu0 0
      %939 = vmatpush1.bf16.msra.mxu0 %v920
      %940 = vmatprep.subr.bf16.mxu0 0
      %941 = vmatpush1.bf16.msra.mxu0 %v921
      %942 = vmatprep.subr.bf16.mxu0 0
      %943 = vmatpush1.bf16.msra.mxu0 %v922
      %944 = vmatprep.subr.bf16.mxu0 0
      %945 = vmatpush1.bf16.msra.mxu0 %v923
      %946 = vmatprep.subr.bf16.mxu0 0
      %947 = vmatpush1.bf16.msra.mxu0 %v924
      %948 = vmatprep.subr.bf16.mxu0 0
      %949 = vmatpush1.bf16.msra.mxu0 %v925
      %950 = vmatprep.subr.bf16.mxu0 0
      %951 = vmatpush1.bf16.msra.mxu0 0
      %952 = vmatprep.subr.bf16.mxu0 0
      %953 = vmatpush1.bf16.msra.mxu0 0
      %954 = vmatprep.subr.bf16.mxu0 0
      %955 = vmatpush1.bf16.msra.mxu0 0
      %956 = vmatprep.subr.bf16.mxu0 0
      %957 = vmatpush1.bf16.msra.mxu0 0
      %958 = vmatprep.subr.bf16.mxu0 0
      %959 = vmatpush1.bf16.msra.mxu0 0
      %960 = vmatprep.subr.bf16.mxu0 0
      %961 = vmatpush1.bf16.msra.mxu0 0
      %962 = vmatprep.subr.bf16.mxu0 0
      %963 = vmatpush1.bf16.msra.mxu0 0
      %964 = vmatprep.subr.bf16.mxu0 0
      %965 = vmatpush1.bf16.msra.mxu0 0
      %966 = vmatprep.mubr.bf16.mxu0 0
      %967 = vmatmul.mubr.bf16.gmra.mrb[0].mxu0 %v862
      %v968 = vpop.f32.mrb[0].mxu0
      %v969 = vadd.f32 0.0, %v968
      %v970 = vpop.f32.mrb[0].mxu0
      %v971 = vpop.f32.mrb[0].mxu0
      %v972 = vadd.f32 0.0, %v971
      %v973 = vpop.f32.mrb[0].mxu0
      %974 = vmatprep.mubr.bf16.mxu0 0
      %975 = vmatmul.mubr.bf16.gmra.mrb[0].mxu0 %v863
      %v976 = vpop.f32.mrb[0].mxu0
      %v977 = vadd.f32 0.0, %v976
      %v978 = vpop.f32.mrb[0].mxu0
      %v979 = vpop.f32.mrb[0].mxu0
      %v980 = vadd.f32 0.0, %v979
      %v981 = vpop.f32.mrb[0].mxu0
      %982 = vmatprep.mubr.bf16.mxu0 0
      %983 = vmatmul.mubr.bf16.gmra.mrb[0].mxu0 %v864
      %v984 = vpop.f32.mrb[0].mxu0
      %v985 = vadd.f32 0.0, %v984
      %v986 = vpop.f32.mrb[0].mxu0
      %v987 = vpop.f32.mrb[0].mxu0
      %v988 = vadd.f32 0.0, %v987
      %v989 = vpop.f32.mrb[0].mxu0
      %990 = vmatprep.mubr.bf16.mxu0 0
      %991 = vmatmul.mubr.bf16.gmra.mrb[0].mxu0 %v865
      %v992 = vpop.f32.mrb[0].mxu0
      %v993 = vadd.f32 0.0, %v992
      %v994 = vpop.f32.mrb[0].mxu0
      %v995 = vpop.f32.mrb[0].mxu0
      %v996 = vadd.f32 0.0, %v995
      %v997 = vpop.f32.mrb[0].mxu0
      %998 = vmatprep.mubr.bf16.mxu0 0
      %999 = vmatmul.mubr.bf16.gmra.mrb[0].mxu0 %v866
      %v1000 = vpop.f32.mrb[0].mxu0
      %v1001 = vadd.f32 0.0, %v1000
      %v1002 = vpop.f32.mrb[0].mxu0
      %v1003 = vpop.f32.mrb[0].mxu0
      %v1004 = vadd.f32 0.0, %v1003
      %v1005 = vpop.f32.mrb[0].mxu0
      %1006 = vmatprep.mubr.bf16.mxu0 0
      %1007 = vmatmul.mubr.bf16.gmra.mrb[0].mxu0 %v867
      %v1008 = vpop.f32.mrb[0].mxu0
      %v1009 = vadd.f32 0.0, %v1008
      %v1010 = vpop.f32.mrb[0].mxu0
      %v1011 = vpop.f32.mrb[0].mxu0
      %v1012 = vadd.f32 0.0, %v1011
      %v1013 = vpop.f32.mrb[0].mxu0
      %1014 = vmatprep.mubr.bf16.mxu0 0
      %1015 = vmatmul.mubr.bf16.gmra.mrb[0].mxu0 %v868
      %v1016 = vpop.f32.mrb[0].mxu0
      %v1017 = vadd.f32 0.0, %v1016
      %v1018 = vpop.f32.mrb[0].mxu0
      %v1019 = vpop.f32.mrb[0].mxu0
      %v1020 = vadd.f32 0.0, %v1019
      %v1021 = vpop.f32.mrb[0].mxu0
      %1022 = vmatprep.mubr.bf16.mxu0 0
      %1023 = vmatmul.mubr.bf16.gmra.mrb[0].mxu0 %v869
      %v1024 = vpop.f32.mrb[0].mxu0
      %v1025 = vadd.f32 0.0, %v1024
      %v1026 = vpop.f32.mrb[0].mxu0
      %v1027 = vpop.f32.mrb[0].mxu0
      %v1028 = vadd.f32 0.0, %v1027
      %v1029 = vpop.f32.mrb[0].mxu0
      %1030 = vdwg.mxu0
      %1032 = vset.pattern.permute.xlu0 0
      %1033 = vperm.xlu0 %1032, %v830
      %v1034 = vpop.permute.xlu0 %1033
      %1037 = vset.pattern.permute.xlu0 0
      %1038 = vperm.xlu0 %1037, %v831
      %v1039 = vpop.permute.xlu0 %1038
      %1042 = vset.pattern.permute.xlu0 0
      %1043 = vperm.xlu0 %1042, %v832
      %v1044 = vpop.permute.xlu0 %1043
      %1047 = vset.pattern.permute.xlu0 0
      %1048 = vperm.xlu0 %1047, %v833
      %v1049 = vpop.permute.xlu0 %1048
      %1052 = vset.pattern.permute.xlu0 0
      %1053 = vperm.xlu0 %1052, %v834
      %v1054 = vpop.permute.xlu0 %1053
      %1057 = vset.pattern.permute.xlu0 0
      %1058 = vperm.xlu0 %1057, %v835
      %v1059 = vpop.permute.xlu0 %1058
      %1062 = vset.pattern.permute.xlu0 0
      %1063 = vperm.xlu0 %1062, %v836
      %v1064 = vpop.permute.xlu0 %1063
      %1067 = vset.pattern.permute.xlu0 0
      %1068 = vperm.xlu0 %1067, %v837
      %v1069 = vpop.permute.xlu0 %1068
      %1072 = vset.pattern.permute.xlu0 0
      %1073 = vperm.xlu0 %1072, %v838
      %v1074 = vpop.permute.xlu0 %1073
      %1077 = vset.pattern.permute.xlu0 0
      %1078 = vperm.xlu0 %1077, %v839
      %v1079 = vpop.permute.xlu0 %1078
      %1082 = vset.pattern.permute.xlu0 0
      %1083 = vperm.xlu0 %1082, %v840
      %v1084 = vpop.permute.xlu0 %1083
      %1087 = vset.pattern.permute.xlu0 0
      %1088 = vperm.xlu0 %1087, %v841
      %v1089 = vpop.permute.xlu0 %1088
      %1092 = vset.pattern.permute.xlu0 0
      %1093 = vperm.xlu0 %1092, %v842
      %v1094 = vpop.permute.xlu0 %1093
      %1097 = vset.pattern.permute.xlu0 0
      %1098 = vperm.xlu0 %1097, %v843
      %v1099 = vpop.permute.xlu0 %1098
      %1102 = vset.pattern.permute.xlu0 0
      %1103 = vperm.xlu0 %1102, %v844
      %v1104 = vpop.permute.xlu0 %1103
      %1107 = vset.pattern.permute.xlu0 0
      %1108 = vperm.xlu0 %1107, %v845
      %v1109 = vpop.permute.xlu0 %1108
      %v1111 = vmul.f32 %v1034, %v969
      %v1112 = vmul.f32 %v1039, %v972
      %v1113 = vmul.f32 %v1044, %v977
      %v1114 = vmul.f32 %v1049, %v980
      %v1115 = vmul.f32 %v1054, %v985
      %v1116 = vmul.f32 %v1059, %v988
      %v1117 = vmul.f32 %v1064, %v993
      %v1118 = vmul.f32 %v1069, %v996
      %v1119 = vmul.f32 %v1074, %v1001
      %v1120 = vmul.f32 %v1079, %v1004
      %v1121 = vmul.f32 %v1084, %v1009
      %v1122 = vmul.f32 %v1089, %v1012
      %v1123 = vmul.f32 %v1094, %v1017
      %v1124 = vmul.f32 %v1099, %v1020
      %v1125 = vmul.f32 %v1104, %v1025
      %v1126 = vmul.f32 %v1109, %v1028
      %v1127 = vld [vmem:[%s267] sm:$0x1]
      %v1129 = vlaneseq
      %v1130 = vshrl.u32 %v1129, 7
      %v1131 = vsub.s32 0, %v1130
      %v1132 = vrot.slane %v1127, %v1131
      %v1134 = vadd.f32 %v1111, %v1132
      %v1135 = vadd.f32 %v1112, %v1132
      %v1136 = vadd.f32 %v1113, %v1132
      %v1137 = vadd.f32 %v1114, %v1132
      %v1138 = vadd.f32 %v1115, %v1132
      %v1139 = vadd.f32 %v1116, %v1132
      %v1140 = vadd.f32 %v1117, %v1132
      %v1141 = vadd.f32 %v1118, %v1132
      %v1142 = vadd.f32 %v1119, %v1132
      %v1143 = vadd.f32 %v1120, %v1132
      %v1144 = vadd.f32 %v1121, %v1132
      %v1145 = vadd.f32 %v1122, %v1132
      %v1146 = vadd.f32 %v1123, %v1132
      %v1147 = vadd.f32 %v1124, %v1132
      %v1148 = vadd.f32 %v1125, %v1132
      %v1149 = vadd.f32 %v1126, %v1132
      %p1150 = scmp.lt.s32.totalorder %s20, 2
      %v1151 = vmax.f32 %v1134, 0.0
      %v1152 = vmax.f32 %v1135, 0.0
      %v1153 = vmax.f32 %v1136, 0.0
      %v1154 = vmax.f32 %v1137, 0.0
      %v1155 = vmax.f32 %v1138, 0.0
      %v1156 = vmax.f32 %v1139, 0.0
      %v1157 = vmax.f32 %v1140, 0.0
      %v1158 = vmax.f32 %v1141, 0.0
      %v1159 = vmax.f32 %v1142, 0.0
      %v1160 = vmax.f32 %v1143, 0.0
      %v1161 = vmax.f32 %v1144, 0.0
      %v1162 = vmax.f32 %v1145, 0.0
      %v1163 = vmax.f32 %v1146, 0.0
      %v1164 = vmax.f32 %v1147, 0.0
      %v1165 = vmax.f32 %v1148, 0.0
      %v1166 = vmax.f32 %v1149, 0.0
      %s1167 = scalar_select %p1150, 1, 0
      %v1168 = vstv %s1167
      %vm1169 = vcmp.eq.s32.totalorder %v1168, 1
      %v1170 = vsel %vm1169, %v1151, %v1134
      %v1171 = vsel %vm1169, %v1152, %v1135
      %v1172 = vsel %vm1169, %v1153, %v1136
      %v1173 = vsel %vm1169, %v1154, %v1137
      %v1174 = vsel %vm1169, %v1155, %v1138
      %v1175 = vsel %vm1169, %v1156, %v1139
      %v1176 = vsel %vm1169, %v1157, %v1140
      %v1177 = vsel %vm1169, %v1158, %v1141
      %v1178 = vsel %vm1169, %v1159, %v1142
      %v1179 = vsel %vm1169, %v1160, %v1143
      %v1180 = vsel %vm1169, %v1161, %v1144
      %v1181 = vsel %vm1169, %v1162, %v1145
      %v1182 = vsel %vm1169, %v1163, %v1146
      %v1183 = vsel %vm1169, %v1164, %v1147
      %v1184 = vsel %vm1169, %v1165, %v1148
      %v1185 = vsel %vm1169, %v1166, %v1149
      %1186 = vst [vmem:[%s272] sm:$0xff] %v1170
      %1187 = vst [vmem:[%s272 + $0x8] sm:$0xff] %v1171
      %1188 = vst [vmem:[%s272 + $0x10] sm:$0xff] %v1172
      %1189 = vst [vmem:[%s272 + $0x18] sm:$0xff] %v1173
      %1190 = vst [vmem:[%s272 + $0x20] sm:$0xff] %v1174
      %1191 = vst [vmem:[%s272 + $0x28] sm:$0xff] %v1175
      %1192 = vst [vmem:[%s272 + $0x30] sm:$0xff] %v1176
      %1193 = vst [vmem:[%s272 + $0x38] sm:$0xff] %v1177
      %1194 = vst [vmem:[%s272 + $0x40] sm:$0xff] %v1178
      %1195 = vst [vmem:[%s272 + $0x48] sm:$0xff] %v1179
      %1196 = vst [vmem:[%s272 + $0x50] sm:$0xff] %v1180
      %1197 = vst [vmem:[%s272 + $0x58] sm:$0xff] %v1181
      %1198 = vst [vmem:[%s272 + $0x60] sm:$0xff] %v1182
      %1199 = vst [vmem:[%s272 + $0x68] sm:$0xff] %v1183
      %1200 = vst [vmem:[%s272 + $0x70] sm:$0xff] %v1184
      %1201 = vst [vmem:[%s272 + $0x78] sm:$0xff] %v1185
      %v1202 = vmul.f32 %v1034, %v1170
      %v1203 = vmul.f32 %v1039, %v1171
      %v1204 = vmul.f32 %v1044, %v1172
      %v1205 = vmul.f32 %v1049, %v1173
      %v1206 = vmul.f32 %v1054, %v1174
      %v1207 = vmul.f32 %v1059, %v1175
      %v1208 = vmul.f32 %v1064, %v1176
      %v1209 = vmul.f32 %v1069, %v1177
      %v1210 = vmul.f32 %v1074, %v1178
      %v1211 = vmul.f32 %v1079, %v1179
      %v1212 = vmul.f32 %v1084, %v1180
      %v1213 = vmul.f32 %v1089, %v1181
      %v1214 = vmul.f32 %v1094, %v1182
      %v1215 = vmul.f32 %v1099, %v1183
      %v1216 = vmul.f32 %v1104, %v1184
      %v1217 = vmul.f32 %v1109, %v1185
      %v1218 = vpack.c.bf16 %v1203, %v1202
      %v1219 = vpack.c.bf16 %v1205, %v1204
      %v1220 = vpack.c.bf16 %v1207, %v1206
      %v1221 = vpack.c.bf16 %v1209, %v1208
      %v1222 = vpack.c.bf16 %v1211, %v1210
      %v1223 = vpack.c.bf16 %v1213, %v1212
      %v1224 = vpack.c.bf16 %v1215, %v1214
      %v1225 = vpack.c.bf16 %v1217, %v1216
      %p1226 = pnand %p1150, %p696
      %p1227 = pneg %p1226
      // Predicated region
      $region53: #{base_gnn_forward.1} parent=39 // pred_check
        _
      $region54: #{base_gnn_forward.1} parent=39 // pred_check_branch
        %1229 = sbr.rel (%p1226) target = $region56
      $region55: #{base_gnn_forward.1} parent=39 // pred_region
        %s1230 = sshra.s32 %s275, 4
        %s1231 = sand.u32 %s275, 15
        %s1232 = smul.addr %s1230, 8
        %s1233 = scalar_lea.vmem [#allocation2], %s1232
        %1234 = vst [vmem:[%s1233] sm:$0xff] %v1218
        %1235 = vst [vmem:[%s1233 + $0x8] sm:$0xff] %v1219
        %1236 = vst [vmem:[%s1233 + $0x10] sm:$0xff] %v1220
        %1237 = vst [vmem:[%s1233 + $0x18] sm:$0xff] %v1221
        %1238 = vst [vmem:[%s1233 + $0x20] sm:$0xff] %v1222
        %1239 = vst [vmem:[%s1233 + $0x28] sm:$0xff] %v1223
        %1240 = vst [vmem:[%s1233 + $0x30] sm:$0xff] %v1224
        %1241 = vst [vmem:[%s1233 + $0x38] sm:$0xff] %v1225
      $region56: #{base_gnn_forward.1} parent=39 // pred_fallthru
        _
      %p1242 = pnand %p1150, %p317
      %p1243 = pneg %p1242
      // Predicated region
      $region57: #{base_gnn_forward.1} parent=39 // pred_check
        _
      $region58: #{base_gnn_forward.1} parent=39 // pred_check_branch
        %1245 = sbr.rel (%p1242) target = $region60
      $region59: #{base_gnn_forward.1} parent=39 // pred_region
        %s1246 = sshra.s32 %s275, 4
        %s1247 = sand.u32 %s275, 15
        %s1248 = smul.addr %s1246, 8
        %s1249 = scalar_lea.vmem [#allocation3], %s1248
        %1250 = vst [vmem:[%s1249] sm:$0xff] %v1218
        %1251 = vst [vmem:[%s1249 + $0x8] sm:$0xff] %v1219
        %1252 = vst [vmem:[%s1249 + $0x10] sm:$0xff] %v1220
        %1253 = vst [vmem:[%s1249 + $0x18] sm:$0xff] %v1221
        %1254 = vst [vmem:[%s1249 + $0x20] sm:$0xff] %v1222
        %1255 = vst [vmem:[%s1249 + $0x28] sm:$0xff] %v1223
        %1256 = vst [vmem:[%s1249 + $0x30] sm:$0xff] %v1224
        %1257 = vst [vmem:[%s1249 + $0x38] sm:$0xff] %v1225
      $region60: #{base_gnn_forward.1} parent=39 // pred_fallthru
        _
      %s1258 = smul.u32 16, %s21
      %p1259 = scmp.lt.s32.totalorder %s1258, 31
      %s1260 = scalar_select %p1259, %s1258, 31
      %s1261 = smul.addr %s1260, 8
      %s1262 = scalar_lea.vmem %s5, %s1261
      // Predicated region
      $region61: #{base_gnn_forward.1} parent=39 // pred_check
        %p1263 = pneg %p166
      $region62: #{base_gnn_forward.1} parent=39 // pred_check_branch
        %1265 = sbr.rel (%p1263) target = $region64
      $region63: #{base_gnn_forward.1} parent=39 // pred_region
        %s1266 = smul.u32 16, %s21
      $region64: #{base_gnn_forward.1} parent=39 // pred_fallthru
        _
    $region40: #{base_gnn_forward.1} parent=5 // pred_fallthru
      _
    %p1267 = scmp.le.s32.totalorder 2, %s11
    // Predicated region
    $region65: #{base_gnn_forward.1} parent=5 // pred_check
      %p1268 = pneg %p1267
    $region66: #{base_gnn_forward.1} parent=5 // pred_check_branch
      %1270 = sbr.rel (%p1268) target = $region68
    $region67: #{base_gnn_forward.1} parent=5 // pred_region
      %s1271 = ssub.s32 %s11, 2
      // Predicated region
      $region69: #{base_gnn_forward.1} parent=67 // pred_check
        %p1272 = pneg %p172
      $region70: #{base_gnn_forward.1} parent=67 // pred_check_branch
        %1274 = sbr.rel (%p1272) target = $region72
      $region71: #{base_gnn_forward.1} parent=67 // pred_region
        %s1275 = smul.u32 16, %s23
        %p1276 = scmp.lt.s32.totalorder %s1275, 31
        %s1277 = scalar_select %p1276, %s1275, 31
        %s1278 = smul.addr %s1277, 8
        %s1279 = scalar_lea.vmem %s5, %s1278
      $region72: #{base_gnn_forward.1} parent=67 // pred_fallthru
        _
    $region68: #{base_gnn_forward.1} parent=5 // pred_fallthru
      _
  $region6: #{base_gnn_forward.1} parent=0 // loop_footer
    %s15 = sadd.s32 1, %s11
  $region7: #{base_gnn_forward.1} parent=0 // loop_footer_branch
    %10 = sbr.rel target = $region3
  $region8: #{base_gnn_forward.1} parent=0 // loop_exit
    _

</llo_original>
